<compile_context>
chip_gen: v7x
topology: tpu7x:2x2x1
jax: 0.10.0
libtpu: 0.0.40
codegen_flags: <defaults>
</compile_context>

<pallas_src>
import math

import jax
import jax.numpy as jnp
from jax.experimental import pallas as pl
from jax.experimental.pallas import tpu as pltpu

K = 5  # both convs are 5x5, stride 1, VALID padding (as in the nn.Module)


def _round_up(x, m):
    return -(-x // m) * m


def _pick_batch_block(N, H, H2):
    """Images per grid step (B) and number of grid steps (G)."""
    # When the grid has >1 step, the row block dims (B*H, B*H2) must be multiples of 8.
    sub = 1
    for d in (H, H2):
        g = 8 // math.gcd(8, d)
        sub = sub * g // math.gcd(sub, g)  # lcm
    cap = max(sub, (32 // sub) * sub)      # at most ~32 images per step
    if N <= cap and N < max(8, 2 * sub):
        return N, 1                        # single step: block == full array, no padding
    G = max(2, -(-N // cap))               # >=2 steps (v7x: one per TensorCore)
    B = _round_up(-(-N // G), sub)
    G = -(-N // B)
    return B, G


def sample_model_pallas(x_nchw, w1, b1, w2, b2):
    """Equivalent of SampleModel.forward.

    x_nchw: (N, 1, H, W)  (PyTorch NCHW)
    w1: (20, 1, 5, 5), b1: (20,);  w2: (20, 20, 5, 5), b2: (20,)
    returns (N, 20, H-8, W-8) in NCHW.
    """
    N, Cin, H, W = x_nchw.shape
    assert Cin == 1, "SampleModel.conv1 expects Cin == 1"
    C1, C2 = w1.shape[0], w2.shape[0]
    H1, W1 = H - K + 1, W - K + 1
    H2, W2 = H1 - K + 1, W1 - K + 1
    A1 = W1 * C1                    # conv1 lanes per row (j1-major, c-minor)
    A1P = _round_up(A1, 128)        # pad so the conv2 im2col chunks are lane-aligned
    OW = W2 * C2                    # output lanes per row (j2-major, o-minor); no padding

    B, G = _pick_batch_block(N, H, H2)
    Np = G * B

    f32 = jnp.float32

    # ---- input: squeeze Cin=1, fold batch into rows -> dense 2-D layout ----
    x3 = x_nchw[:, 0].astype(f32)                                  # (N, H, W)
    if Np != N:
        x3 = jnp.pad(x3, ((0, Np - N), (0, 0), (0, 0)))
    x2d = x3.reshape(Np * H, W)                                    # (Np*H, W)

    # ---- Toeplitz ("conv as banded matmul") weights, built once in the wrapper ----
    # t1[dy*W + w, j1*C1 + c] = w1[c, 0, dy, w - j1]   for 0 <= w - j1 < K, else 0
    dxm = jnp.arange(W)[:, None] - jnp.arange(W1)[None, :]         # (W, W1): dx = w - j1
    v1 = (dxm >= 0) & (dxm < K)
    w1t = jnp.transpose(w1[:, 0].astype(f32), (1, 2, 0))           # (dy, dx, c)
    t1 = w1t[:, jnp.clip(dxm, 0, K - 1), :]                        # (dy, W, W1, c)
    t1 = jnp.where(v1[None, :, :, None], t1, 0.0)
    t1 = t1.reshape(K * W, A1)
    t1 = jnp.pad(t1, ((0, 0), (0, A1P - A1)))                      # (K*W, A1P)
    b1r = jnp.pad(jnp.tile(b1.astype(f32), W1), (0, A1P - A1)).reshape(1, A1P)

    # t2[dy2*A1P + j1*C1 + c, j2*C2 + o] = w2[o, c, dy2, j1 - j2]  for 0 <= j1 - j2 < K
    dxm2 = jnp.arange(W1)[:, None] - jnp.arange(W2)[None, :]       # (W1, W2): dx2 = j1 - j2
    v2 = (dxm2 >= 0) & (dxm2 < K)
    w2t = jnp.transpose(w2.astype(f32), (2, 1, 3, 0))              # (dy2, c, dx2, o)
    t2 = w2t[:, :, jnp.clip(dxm2, 0, K - 1), :]                    # (dy2, c, W1, W2, o)
    t2 = jnp.where(v2[None, None, :, :, None], t2, 0.0)
    t2 = jnp.transpose(t2, (0, 2, 1, 3, 4)).reshape(K, A1, OW)     # (dy2, j1*C1+c, j2*C2+o)
    t2 = jnp.pad(t2, ((0, 0), (0, A1P - A1), (0, 0))).reshape(K * A1P, OW)
    b2r = jnp.tile(b2.astype(f32), W2).reshape(1, OW)

    R = B * H                       # rows per block
    R1 = R - (K - 1)                # valid conv1 row count (incl. cross-image garbage rows)
    R2 = R1 - (K - 1)               # valid conv2 row count

    def kernel(x_ref, t1_ref, b1_ref, t2_ref, b2_ref, o_ref, xc_ref, ac_ref):
        # conv1 row-im2col: xc[r, dy*W + w] = x[r + dy, w]
        for dy in range(K):
            xc_ref[:, dy * W:(dy + 1) * W] = x_ref[dy:dy + R1, :]
        a1 = jnp.dot(xc_ref[...], t1_ref[...],
                     preferred_element_type=jnp.float32)            # (R1, A1P)
        a1 = jnp.maximum(a1 + b1_ref[...], 0.0)
        # conv2 row-im2col: ac[r, dy*A1P + l] = a1[r + dy, l]  (128-aligned lane chunks)
        for dy in range(K):
            ac_ref[:, dy * A1P:(dy + 1) * A1P] = a1[dy:dy + R2, :]
        # ONE deep MXU dot: contraction depth K*A1P (= 1280 here)
        out = jnp.dot(ac_ref[...], t2_ref[...],
                      preferred_element_type=jnp.float32)           # (R2, OW)
        out = jnp.maximum(out + b2_ref[...], 0.0)
        # keep only rows i2 < H2 of each image (drop cross-image garbage rows)
        for b in range(B):
            o_ref[b * H2:(b + 1) * H2, :] = out[b * H:b * H + H2, :]

    flops = 2 * G * (R1 * (K * W) * A1P + R2 * (K * A1P) * OW)
    bytes_accessed = 4 * (Np * H * W + t1.size + b1r.size + t2.size + b2r.size
                          + Np * H2 * OW)

    out2d = pl.pallas_call(
        kernel,
        out_shape=jax.ShapeDtypeStruct((Np * H2, OW), jnp.float32),
        grid_spec=pltpu.PrefetchScalarGridSpec(
            num_scalar_prefetch=0,
            grid=(G,),
            in_specs=[
                pl.BlockSpec((R, W), lambda n: (n, 0)),            # x rows for B images
                pl.BlockSpec((K * W, A1P), lambda n: (0, 0)),      # conv1 Toeplitz weights
                pl.BlockSpec((1, A1P), lambda n: (0, 0)),          # conv1 bias (tiled)
                pl.BlockSpec((K * A1P, OW), lambda n: (0, 0)),     # conv2 Toeplitz weights
                pl.BlockSpec((1, OW), lambda n: (0, 0)),           # conv2 bias (tiled)
            ],
            out_specs=pl.BlockSpec((B * H2, OW), lambda n: (n, 0)),
            scratch_shapes=[
                pltpu.VMEM((R1, K * W), jnp.float32),              # conv1 row-im2col
                pltpu.VMEM((R2, K * A1P), jnp.float32),            # conv2 row-im2col
            ],
        ),
        compiler_params=pltpu.CompilerParams(
            dimension_semantics=("parallel",)),
        cost_estimate=pl.CostEstimate(
            flops=int(flops), transcendentals=0,
            bytes_accessed=int(bytes_accessed)),
    )(x2d, t1, b1r, t2, b2r)

    out = out2d.reshape(Np, H2, W2, C2)[:N]                        # drop batch padding
    return jnp.transpose(out, (0, 3, 1, 2))                        # back to NCHW


def _reference(x_nchw, w1, b1, w2, b2):
    """Pure-JAX reference (XLA conv) for correctness check."""
    dn = jax.lax.conv_dimension_numbers(x_nchw.shape, w1.shape, ("NCHW", "OIHW", "NCHW"))
    y = jax.lax.conv_general_dilated(x_nchw, w1, (1, 1), "VALID", dimension_numbers=dn)
    y = jnp.maximum(y + b1[None, :, None, None], 0.0)
    dn2 = jax.lax.conv_dimension_numbers(y.shape, w2.shape, ("NCHW", "OIHW", "NCHW"))
    y = jax.lax.conv_general_dilated(y, w2, (1, 1), "VALID", dimension_numbers=dn2)
    return jnp.maximum(y + b2[None, :, None, None], 0.0)


if __name__ == "__main__":
    key = jax.random.PRNGKey(0)
    kx, k1, kb1, k2, kb2 = jax.random.split(key, 5)

    N, Cin, H, W = 2, 1, 16, 16
    C1, C2 = 20, 20

    x = jax.random.normal(kx, (N, Cin, H, W), dtype=jnp.float32)
    # Deterministic synthetic parameters (shapes from Conv2d(1,20,5), Conv2d(20,20,5))
    w1 = 0.1 * jax.random.normal(k1, (C1, Cin, K, K), dtype=jnp.float32)
    b1 = 0.1 * jax.random.normal(kb1, (C1,), dtype=jnp.float32)
    w2 = 0.1 * jax.random.normal(k2, (C2, C1, K, K), dtype=jnp.float32)
    b2 = 0.1 * jax.random.normal(kb2, (C2,), dtype=jnp.float32)

    out = sample_model_pallas(x, w1, b1, w2, b2)
    out = jax.block_until_ready(out)

    ref = jax.block_until_ready(_reference(x, w1, b1, w2, b2))
    assert out.shape == (N, C2, H - 8, W - 8), out.shape
    assert jnp.allclose(out, ref, rtol=1e-4, atol=1e-4), \
        float(jnp.max(jnp.abs(out - ref)))

    print("KERNEL_OK")
</pallas_src>

<mosaic_0001>
module attributes {stable_mosaic.version = 11 : i64} {
  func.func @kernel(%arg0: i32, %arg1: memref<32x16xf32, #tpu.memory_space<vmem>>, %arg2: memref<80x256xf32, #tpu.memory_space<vmem>>, %arg3: memref<1x256xf32, #tpu.memory_space<vmem>>, %arg4: memref<1280x160xf32, #tpu.memory_space<vmem>>, %arg5: memref<1x160xf32, #tpu.memory_space<vmem>>, %arg6: memref<16x160xf32, #tpu.memory_space<vmem>>, %arg7: memref<28x80xf32, #tpu.memory_space<vmem>>, %arg8: memref<24x1280xf32, #tpu.memory_space<vmem>>) attributes {dimension_semantics = [#tpu.dimension_semantics<parallel>], iteration_bounds = array<i64: 1>, scalar_prefetch = 0 : i64, scratch_operands = 2 : i64, tpu.core_type = #tpu.core_type<tc>, window_params = [{transform_indices = @transform_0, window_bounds = array<i64: 32, 16>}, {pipeline_mode = #tpu.pipeline_mode<synchronous>, transform_indices = @transform_1, window_bounds = array<i64: 80, 256>}, {pipeline_mode = #tpu.pipeline_mode<synchronous>, transform_indices = @transform_2, window_bounds = array<i64: 1, 256>}, {pipeline_mode = #tpu.pipeline_mode<synchronous>, transform_indices = @transform_3, window_bounds = array<i64: 1280, 160>}, {pipeline_mode = #tpu.pipeline_mode<synchronous>, transform_indices = @transform_4, window_bounds = array<i64: 1, 160>}, {transform_indices = @transform_5, window_bounds = array<i64: 16, 160>}]} {
    %c0 = arith.constant 0 : index
    %c0_0 = arith.constant 0 : index
    %0 = vector.load %arg1[%c0, %c0_0] : memref<32x16xf32, #tpu.memory_space<vmem>>, vector<28x16xf32>
    %c0_1 = arith.constant 0 : index
    %c0_2 = arith.constant 0 : index
    %1 = vector.load %arg7[%c0_1, %c0_2] : memref<28x80xf32, #tpu.memory_space<vmem>>, vector<28x16xf32>
    tpu.vector_store %arg7[%c0_1, %c0_2], %0 {strides = array<i32>} : memref<28x80xf32, #tpu.memory_space<vmem>>, vector<28x16xf32>,
    %c1 = arith.constant 1 : index
    %c0_3 = arith.constant 0 : index
    %2 = vector.load %arg1[%c1, %c0_3] : memref<32x16xf32, #tpu.memory_space<vmem>>, vector<28x16xf32>
    %c0_4 = arith.constant 0 : index
    %c16 = arith.constant 16 : index
    %3 = vector.load %arg7[%c0_4, %c16] : memref<28x80xf32, #tpu.memory_space<vmem>>, vector<28x16xf32>
    tpu.vector_store %arg7[%c0_4, %c16], %2 {strides = array<i32>} : memref<28x80xf32, #tpu.memory_space<vmem>>, vector<28x16xf32>,
    %c2 = arith.constant 2 : index
    %c0_5 = arith.constant 0 : index
    %4 = vector.load %arg1[%c2, %c0_5] : memref<32x16xf32, #tpu.memory_space<vmem>>, vector<28x16xf32>
    %c0_6 = arith.constant 0 : index
    %c32 = arith.constant 32 : index
    %5 = vector.load %arg7[%c0_6, %c32] : memref<28x80xf32, #tpu.memory_space<vmem>>, vector<28x16xf32>
    tpu.vector_store %arg7[%c0_6, %c32], %4 {strides = array<i32>} : memref<28x80xf32, #tpu.memory_space<vmem>>, vector<28x16xf32>,
    %c3 = arith.constant 3 : index
    %c0_7 = arith.constant 0 : index
    %6 = vector.load %arg1[%c3, %c0_7] : memref<32x16xf32, #tpu.memory_space<vmem>>, vector<28x16xf32>
    %c0_8 = arith.constant 0 : index
    %c48 = arith.constant 48 : index
    %7 = vector.load %arg7[%c0_8, %c48] : memref<28x80xf32, #tpu.memory_space<vmem>>, vector<28x16xf32>
    tpu.vector_store %arg7[%c0_8, %c48], %6 {strides = array<i32>} : memref<28x80xf32, #tpu.memory_space<vmem>>, vector<28x16xf32>,
    %c4 = arith.constant 4 : index
    %c0_9 = arith.constant 0 : index
    %8 = vector.load %arg1[%c4, %c0_9] : memref<32x16xf32, #tpu.memory_space<vmem>>, vector<28x16xf32>
    %c0_10 = arith.constant 0 : index
    %c64 = arith.constant 64 : index
    %9 = vector.load %arg7[%c0_10, %c64] : memref<28x80xf32, #tpu.memory_space<vmem>>, vector<28x16xf32>
    tpu.vector_store %arg7[%c0_10, %c64], %8 {strides = array<i32>} : memref<28x80xf32, #tpu.memory_space<vmem>>, vector<28x16xf32>,
    %c0_11 = arith.constant 0 : index
    %c0_12 = arith.constant 0 : index
    %10 = vector.load %arg7[%c0_11, %c0_12] : memref<28x80xf32, #tpu.memory_space<vmem>>, vector<28x80xf32>
    %c0_13 = arith.constant 0 : index
    %c0_14 = arith.constant 0 : index
    %11 = vector.load %arg2[%c0_13, %c0_14] : memref<80x256xf32, #tpu.memory_space<vmem>>, vector<80x256xf32>
    %cst = arith.constant dense<0.000000e+00> : vector<28x256xf32>
    %12 = tpu.matmul %10, %11, %cst {dimension_numbers = #tpu.dot_dimension_numbers<[1], [0], [0], [1], [0, 0, 1, 1], [], []>} : vector<28x80xf32>, vector<80x256xf32>, vector<28x256xf32> -> vector<28x256xf32>
    %c0_15 = arith.constant 0 : index
    %c0_16 = arith.constant 0 : index
    %13 = vector.load %arg3[%c0_15, %c0_16] : memref<1x256xf32, #tpu.memory_space<vmem>>, vector<1x256xf32>
    %14 = vector.broadcast %13 : vector<1x256xf32> to vector<28x256xf32>
    %15 = arith.addf %12, %14 : vector<28x256xf32>
    %cst_17 = arith.constant 0.000000e+00 : f32
    %16 = vector.broadcast %cst_17 : f32 to vector<28x256xf32>
    %17 = arith.maximumf %15, %16 : vector<28x256xf32>
    %18 = vector.extract_strided_slice %17 {offsets = [0, 0], sizes = [24, 256], strides = [1, 1]} : vector<28x256xf32> to vector<24x256xf32>
    %c0_18 = arith.constant 0 : index
    %c0_19 = arith.constant 0 : index
    %19 = vector.load %arg8[%c0_18, %c0_19] : memref<24x1280xf32, #tpu.memory_space<vmem>>, vector<24x256xf32>
    tpu.vector_store %arg8[%c0_18, %c0_19], %18 {strides = array<i32>} : memref<24x1280xf32, #tpu.memory_space<vmem>>, vector<24x256xf32>,
    %20 = vector.extract_strided_slice %17 {offsets = [1, 0], sizes = [24, 256], strides = [1, 1]} : vector<28x256xf32> to vector<24x256xf32>
    %c0_20 = arith.constant 0 : index
    %c256 = arith.constant 256 : index
    %21 = vector.load %arg8[%c0_20, %c256] : memref<24x1280xf32, #tpu.memory_space<vmem>>, vector<24x256xf32>
    tpu.vector_store %arg8[%c0_20, %c256], %20 {strides = array<i32>} : memref<24x1280xf32, #tpu.memory_space<vmem>>, vector<24x256xf32>,
    %22 = vector.extract_strided_slice %17 {offsets = [2, 0], sizes = [24, 256], strides = [1, 1]} : vector<28x256xf32> to vector<24x256xf32>
    %c0_21 = arith.constant 0 : index
    %c512 = arith.constant 512 : index
    %23 = vector.load %arg8[%c0_21, %c512] : memref<24x1280xf32, #tpu.memory_space<vmem>>, vector<24x256xf32>
    tpu.vector_store %arg8[%c0_21, %c512], %22 {strides = array<i32>} : memref<24x1280xf32, #tpu.memory_space<vmem>>, vector<24x256xf32>,
    %24 = vector.extract_strided_slice %17 {offsets = [3, 0], sizes = [24, 256], strides = [1, 1]} : vector<28x256xf32> to vector<24x256xf32>
    %c0_22 = arith.constant 0 : index
    %c768 = arith.constant 768 : index
    %25 = vector.load %arg8[%c0_22, %c768] : memref<24x1280xf32, #tpu.memory_space<vmem>>, vector<24x256xf32>
    tpu.vector_store %arg8[%c0_22, %c768], %24 {strides = array<i32>} : memref<24x1280xf32, #tpu.memory_space<vmem>>, vector<24x256xf32>,
    %26 = vector.extract_strided_slice %17 {offsets = [4, 0], sizes = [24, 256], strides = [1, 1]} : vector<28x256xf32> to vector<24x256xf32>
    %c0_23 = arith.constant 0 : index
    %c1024 = arith.constant 1024 : index
    %27 = vector.load %arg8[%c0_23, %c1024] : memref<24x1280xf32, #tpu.memory_space<vmem>>, vector<24x256xf32>
    tpu.vector_store %arg8[%c0_23, %c1024], %26 {strides = array<i32>} : memref<24x1280xf32, #tpu.memory_space<vmem>>, vector<24x256xf32>,
    %c0_24 = arith.constant 0 : index
    %c0_25 = arith.constant 0 : index
    %28 = vector.load %arg8[%c0_24, %c0_25] : memref<24x1280xf32, #tpu.memory_space<vmem>>, vector<24x1280xf32>
    %c0_26 = arith.constant 0 : index
    %c0_27 = arith.constant 0 : index
    %29 = vector.load %arg4[%c0_26, %c0_27] : memref<1280x160xf32, #tpu.memory_space<vmem>>, vector<1280x160xf32>
    %cst_28 = arith.constant dense<0.000000e+00> : vector<24x160xf32>
    %30 = tpu.matmul %28, %29, %cst_28 {dimension_numbers = #tpu.dot_dimension_numbers<[1], [0], [0], [1], [0, 0, 1, 1], [], []>} : vector<24x1280xf32>, vector<1280x160xf32>, vector<24x160xf32> -> vector<24x160xf32>
    %c0_29 = arith.constant 0 : index
    %c0_30 = arith.constant 0 : index
    %31 = vector.load %arg5[%c0_29, %c0_30] : memref<1x160xf32, #tpu.memory_space<vmem>>, vector<1x160xf32>
    %32 = vector.broadcast %31 : vector<1x160xf32> to vector<24x160xf32>
    %33 = arith.addf %30, %32 : vector<24x160xf32>
    %cst_31 = arith.constant 0.000000e+00 : f32
    %34 = vector.broadcast %cst_31 : f32 to vector<24x160xf32>
    %35 = arith.maximumf %33, %34 : vector<24x160xf32>
    %36 = vector.extract_strided_slice %35 {offsets = [0, 0], sizes = [8, 160], strides = [1, 1]} : vector<24x160xf32> to vector<8x160xf32>
    %c0_32 = arith.constant 0 : index
    %c0_33 = arith.constant 0 : index
    %37 = vector.load %arg6[%c0_32, %c0_33] : memref<16x160xf32, #tpu.memory_space<vmem>>, vector<8x160xf32>
    tpu.vector_store %arg6[%c0_32, %c0_33], %36 {strides = array<i32>} : memref<16x160xf32, #tpu.memory_space<vmem>>, vector<8x160xf32>,
    %38 = vector.extract_strided_slice %35 {offsets = [16, 0], sizes = [8, 160], strides = [1, 1]} : vector<24x160xf32> to vector<8x160xf32>
    %c8 = arith.constant 8 : index
    %c0_34 = arith.constant 0 : index
    %39 = vector.load %arg6[%c8, %c0_34] : memref<16x160xf32, #tpu.memory_space<vmem>>, vector<8x160xf32>
    tpu.vector_store %arg6[%c8, %c0_34], %38 {strides = array<i32>} : memref<16x160xf32, #tpu.memory_space<vmem>>, vector<8x160xf32>,
    return
  }
  func.func @transform_0(%arg0: i32) -> (i32, i32) {
    %c0_i32 = arith.constant 0 : i32
    %c0_i32_0 = arith.constant 0 : i32
    return %arg0, %c0_i32 : i32, i32
  }
  func.func @transform_1(%arg0: i32) -> (i32, i32) {
    %c0_i32 = arith.constant 0 : i32
    %c0_i32_0 = arith.constant 0 : i32
    %c0_i32_1 = arith.constant 0 : i32
    return %c0_i32, %c0_i32_0 : i32, i32
  }
  func.func @transform_2(%arg0: i32) -> (i32, i32) {
    %c0_i32 = arith.constant 0 : i32
    %c0_i32_0 = arith.constant 0 : i32
    %c0_i32_1 = arith.constant 0 : i32
    return %c0_i32, %c0_i32_0 : i32, i32
  }
  func.func @transform_3(%arg0: i32) -> (i32, i32) {
    %c0_i32 = arith.constant 0 : i32
    %c0_i32_0 = arith.constant 0 : i32
    %c0_i32_1 = arith.constant 0 : i32
    return %c0_i32, %c0_i32_0 : i32, i32
  }
  func.func @transform_4(%arg0: i32) -> (i32, i32) {
    %c0_i32 = arith.constant 0 : i32
    %c0_i32_0 = arith.constant 0 : i32
    %c0_i32_1 = arith.constant 0 : i32
    return %c0_i32, %c0_i32_0 : i32, i32
  }
  func.func @transform_5(%arg0: i32) -> (i32, i32) {
    %c0_i32 = arith.constant 0 : i32
    %c0_i32_0 = arith.constant 0 : i32
    return %arg0, %c0_i32 : i32, i32
  }
}

</mosaic_0001>

<llo_original>
// kernel: tpu_custom_call.1
$region0: #{tpu_custom_call.1}
  #allocation0 [shape = 'u32[]', space=smem, size = 0x4, offset = 0x4, fixed_abs, tag = 'smem constant byte address 0x4 - core index']
  #allocation1 [shape = 'u32[144,128]{1,0:T(1,128)}', space=vmem, size = 0x12000, scoped, tag = 'internal scratch']
  #allocation2 [shape = 'f32[28,80]{1,0:T(8,128)}', space=vmem, size = 0x4000, scoped, tag = 'scratch operand']
  #allocation3 [shape = 'f32[24,1280]{1,0:T(8,128)}', space=vmem, size = 0x1e000, scoped, tag = 'scratch operand']
  %s0 = inlined_call_operand.vmem [shape: f32[32,16], index: 0, kind: input, shape index: {}]
  %s1 = inlined_call_operand.vmem [shape: f32[80,256], index: 1, kind: input, shape index: {}]
  %s2 = inlined_call_operand.vmem [shape: f32[1,256], index: 2, kind: input, shape index: {}]
  %s3 = inlined_call_operand.vmem [shape: f32[1280,160], index: 3, kind: input, shape index: {}]
  %s4 = inlined_call_operand.vmem [shape: f32[1,160], index: 4, kind: input, shape index: {}]
  %s5 = inlined_call_operand.hbm [shape: f32[16,160], index: 5, kind: output, shape index: {}]
  %s6 = sld [smem:[#allocation0]]
  $region30: #{tpu_custom_call.1} parent=0
    _
  %s8 = ssub.s32 1, %s6
  %s9 = scalar_select 0, %s8, %s6
  $region1: #{tpu_custom_call.1} parent=0
    #allocation4 [shape = 'u8[16384]{0}', space=vmem, size = 0x4000, scoped, tag = 'output window, operand 0, single buffered']
    #allocation5 [shape = 's32[1]{0}', space=sflag, size = 0x4, scoped, tag = 'scoped memory for tpu_custom_call.1']
    %10 = vsyncpa [#allocation5], 0
    // Predicated region
    $region2: #{tpu_custom_call.1} parent=1 // pred_check
      _
    $region3: #{tpu_custom_call.1} parent=1 // pred_check_branch
      %12 = sbr.rel (0) target = $region5
    $region4: #{tpu_custom_call.1} parent=1 // pred_region
      _
    $region5: #{tpu_custom_call.1} parent=1 // pred_fallthru
      _
    // Predicated region
    $region6: #{tpu_custom_call.1} parent=1 // pred_check
      _
    $region7: #{tpu_custom_call.1} parent=1 // pred_check_branch
      %14 = sbr.rel (0) target = $region9
    $region8: #{tpu_custom_call.1} parent=1 // pred_region
      _
    $region9: #{tpu_custom_call.1} parent=1 // pred_fallthru
      _
    // Predicated region
    $region10: #{tpu_custom_call.1} parent=1 // pred_check
      _
    $region11: #{tpu_custom_call.1} parent=1 // pred_check_branch
      %16 = sbr.rel (0) target = $region13
    $region12: #{tpu_custom_call.1} parent=1 // pred_region
      _
    $region13: #{tpu_custom_call.1} parent=1 // pred_fallthru
      _
    // Predicated region
    $region14: #{tpu_custom_call.1} parent=1 // pred_check
      _
    $region15: #{tpu_custom_call.1} parent=1 // pred_check_branch
      %18 = sbr.rel (0) target = $region17
    $region16: #{tpu_custom_call.1} parent=1 // pred_region
      _
    $region17: #{tpu_custom_call.1} parent=1 // pred_fallthru
      _
    // Predicated region
    $region18: #{tpu_custom_call.1} parent=1 // pred_check
      _
    $region19: #{tpu_custom_call.1} parent=1 // pred_check_branch
      %20 = sbr.rel (0) target = $region21
    $region20: #{tpu_custom_call.1} parent=1 // pred_region
      _
    $region21: #{tpu_custom_call.1} parent=1 // pred_fallthru
      _
    %v21 = vld [vmem:[%s0] sm:$0xff]
    %v22 = vld [vmem:[%s0 + $0x8] sm:$0xff]
    %v23 = vld [vmem:[%s0 + $0x10] sm:$0xff]
    %v24 = vld [vmem:[%s0 + $0x18] sm:$0xf]
    %vm25 = vcmask 130048
    %26 = vst.msk [vmem:[#allocation2] sm:$0xff] %vm25, %v21
    %27 = vst.msk [vmem:[#allocation2 + $0x8] sm:$0xff] %vm25, %v22
    %28 = vst.msk [vmem:[#allocation2 + $0x10] sm:$0xff] %vm25, %v23
    %vm29 = vcmask 125952
    %30 = vst.msk [vmem:[#allocation2 + $0x18] sm:$0xf] %vm29, %v24
    %v31 = vld [vmem:[%s0 + $0x1] sm:$0xff]
    %v32 = vld [vmem:[%s0 + $0x9] sm:$0xff]
    %v33 = vld [vmem:[%s0 + $0x11] sm:$0xff]
    %v34 = vld [vmem:[%s0 + $0x19] sm:$0xf]
    %39 = vrot.lane.b32.xlu0 %v31, 16
    %v40 = vpop.permute.xlu0 %39
    %41 = vrot.lane.b32.xlu0 %v32, 16
    %v42 = vpop.permute.xlu0 %41
    %43 = vrot.lane.b32.xlu0 %v33, 16
    %v44 = vpop.permute.xlu0 %43
    %45 = vrot.lane.b32.xlu0 %v34, 16
    %v46 = vpop.permute.xlu0 %45
    %vm51 = vcmask 261248
    %52 = vst.msk [vmem:[#allocation2] sm:$0xff] %vm51, %v40
    %53 = vst.msk [vmem:[#allocation2 + $0x8] sm:$0xff] %vm51, %v42
    %54 = vst.msk [vmem:[#allocation2 + $0x10] sm:$0xff] %vm51, %v44
    %vm55 = vcmask 257152
    %56 = vst.msk [vmem:[#allocation2 + $0x18] sm:$0xf] %vm55, %v46
    %v57 = vld [vmem:[%s0 + $0x2] sm:$0xff]
    %v58 = vld [vmem:[%s0 + $0xa] sm:$0xff]
    %v59 = vld [vmem:[%s0 + $0x12] sm:$0xff]
    %v60 = vld [vmem:[%s0 + $0x1a] sm:$0xf]
    %65 = vrot.lane.b32.xlu0 %v57, 32
    %v66 = vpop.permute.xlu0 %65
    %67 = vrot.lane.b32.xlu0 %v58, 32
    %v68 = vpop.permute.xlu0 %67
    %69 = vrot.lane.b32.xlu0 %v59, 32
    %v70 = vpop.permute.xlu0 %69
    %71 = vrot.lane.b32.xlu0 %v60, 32
    %v72 = vpop.permute.xlu0 %71
    %vm77 = vcmask 392448
    %78 = vst.msk [vmem:[#allocation2] sm:$0xff] %vm77, %v66
    %79 = vst.msk [vmem:[#allocation2 + $0x8] sm:$0xff] %vm77, %v68
    %80 = vst.msk [vmem:[#allocation2 + $0x10] sm:$0xff] %vm77, %v70
    %vm81 = vcmask 388352
    %82 = vst.msk [vmem:[#allocation2 + $0x18] sm:$0xf] %vm81, %v72
    %v83 = vld [vmem:[%s0 + $0x3] sm:$0xff]
    %v84 = vld [vmem:[%s0 + $0xb] sm:$0xff]
    %v85 = vld [vmem:[%s0 + $0x13] sm:$0xff]
    %v86 = vld [vmem:[%s0 + $0x1b] sm:$0xf]
    %91 = vrot.lane.b32.xlu0 %v83, 48
    %v92 = vpop.permute.xlu0 %91
    %93 = vrot.lane.b32.xlu0 %v84, 48
    %v94 = vpop.permute.xlu0 %93
    %95 = vrot.lane.b32.xlu0 %v85, 48
    %v96 = vpop.permute.xlu0 %95
    %97 = vrot.lane.b32.xlu0 %v86, 48
    %v98 = vpop.permute.xlu0 %97
    %vm103 = vcmask 523648
    %104 = vst.msk [vmem:[#allocation2] sm:$0xff] %vm103, %v92
    %105 = vst.msk [vmem:[#allocation2 + $0x8] sm:$0xff] %vm103, %v94
    %106 = vst.msk [vmem:[#allocation2 + $0x10] sm:$0xff] %vm103, %v96
    %vm107 = vcmask 519552
    %108 = vst.msk [vmem:[#allocation2 + $0x18] sm:$0xf] %vm107, %v98
    %v109 = vld [vmem:[%s0 + $0x4] sm:$0xff]
    %v110 = vld [vmem:[%s0 + $0xc] sm:$0xff]
    %v111 = vld [vmem:[%s0 + $0x14] sm:$0xff]
    %v112 = vld [vmem:[%s0 + $0x1c] sm:$0xf]
    %117 = vrot.lane.b32.xlu0 %v109, 64
    %v118 = vpop.permute.xlu0 %117
    %119 = vrot.lane.b32.xlu0 %v110, 64
    %v120 = vpop.permute.xlu0 %119
    %121 = vrot.lane.b32.xlu0 %v111, 64
    %v122 = vpop.permute.xlu0 %121
    %123 = vrot.lane.b32.xlu0 %v112, 64
    %v124 = vpop.permute.xlu0 %123
    %vm129 = vcmask 654848
    %130 = vst.msk [vmem:[#allocation2] sm:$0xff] %vm129, %v118
    %131 = vst.msk [vmem:[#allocation2 + $0x8] sm:$0xff] %vm129, %v120
    %132 = vst.msk [vmem:[#allocation2 + $0x10] sm:$0xff] %vm129, %v122
    %vm133 = vcmask 650752
    %134 = vst.msk [vmem:[#allocation2 + $0x18] sm:$0xf] %vm133, %v124
    %v135 = vld [vmem:[#allocation2] sm:$0xff]
    %v136 = vld [vmem:[#allocation2 + $0x8] sm:$0xff]
    %v137 = vld [vmem:[#allocation2 + $0x10] sm:$0xff]
    %v138 = vld [vmem:[#allocation2 + $0x18] sm:$0xf]
    %v139 = vld [vmem:[%s1] sm:$0xff]
    %v140 = vld [vmem:[%s1 + $0x8] sm:$0xff]
    %v141 = vld [vmem:[%s1 + $0x10] sm:$0xff]
    %v142 = vld [vmem:[%s1 + $0x18] sm:$0xff]
    %v143 = vld [vmem:[%s1 + $0x20] sm:$0xff]
    %v144 = vld [vmem:[%s1 + $0x28] sm:$0xff]
    %v145 = vld [vmem:[%s1 + $0x30] sm:$0xff]
    %v146 = vld [vmem:[%s1 + $0x38] sm:$0xff]
    %v147 = vld [vmem:[%s1 + $0x40] sm:$0xff]
    %v148 = vld [vmem:[%s1 + $0x48] sm:$0xff]
    %v149 = vld [vmem:[%s1 + $0x50] sm:$0xff]
    %v150 = vld [vmem:[%s1 + $0x58] sm:$0xff]
    %v151 = vld [vmem:[%s1 + $0x60] sm:$0xff]
    %v152 = vld [vmem:[%s1 + $0x68] sm:$0xff]
    %v153 = vld [vmem:[%s1 + $0x70] sm:$0xff]
    %v154 = vld [vmem:[%s1 + $0x78] sm:$0xff]
    %v155 = vld [vmem:[%s1 + $0x80] sm:$0xff]
    %v156 = vld [vmem:[%s1 + $0x88] sm:$0xff]
    %v157 = vld [vmem:[%s1 + $0x90] sm:$0xff]
    %v158 = vld [vmem:[%s1 + $0x98] sm:$0xff]
    %v159 = vld [vmem:[%s2] sm:$0x3]
    %v161 = vlaneseq
    %v162 = vshrl.u32 %v161, 7
    %v163 = vsub.s32 0, %v162
    %v164 = vrot.slane %v159, %v163
    %v165 = vlaneseq
    %v166 = vshrl.u32 %v165, 7
    %v167 = vsub.s32 1, %v166
    %v168 = vrot.slane %v159, %v167
    %vm171 = vcmask 654336
    %v173 = vsel %vm171, %v135, 0
    %v176 = vsel %vm171, %v136, 0
    %v179 = vsel %vm171, %v137, 0
    %v182 = vsel %vm171, %v138, 0
    %184 = vmatprep.subr.mxu0 %v140
    %185 = vmatpush1.msra.mxu0 %v139
    %186 = vmatprep.subr.mxu0 %v142
    %187 = vmatpush1.msra.mxu0 %v141
    %188 = vmatprep.subr.mxu0 %v144
    %189 = vmatpush1.msra.mxu0 %v143
    %190 = vmatprep.subr.mxu0 %v146
    %191 = vmatpush1.msra.mxu0 %v145
    %192 = vmatprep.subr.mxu0 %v148
    %193 = vmatpush1.msra.mxu0 %v147
    %194 = vmatprep.subr.mxu0 %v150
    %195 = vmatpush1.msra.mxu0 %v149
    %196 = vmatprep.subr.mxu0 %v152
    %197 = vmatpush1.msra.mxu0 %v151
    %198 = vmatprep.subr.mxu0 %v154
    %199 = vmatpush1.msra.mxu0 %v153
    %200 = vmatprep.subr.mxu0 %v156
    %201 = vmatpush1.msra.mxu0 %v155
    %202 = vmatprep.subr.mxu0 %v158
    %203 = vmatpush1.msra.mxu0 %v157
    %204 = vmatprep.subr.mxu0 0.0
    %205 = vmatpush1.msra.mxu0 0.0
    %206 = vmatprep.subr.mxu0 0.0
    %207 = vmatpush1.msra.mxu0 0.0
    %208 = vmatprep.subr.mxu0 0.0
    %209 = vmatpush1.msra.mxu0 0.0
    %210 = vmatprep.subr.mxu0 0.0
    %211 = vmatpush1.msra.mxu0 0.0
    %212 = vmatprep.subr.mxu0 0.0
    %213 = vmatpush1.msra.mxu0 0.0
    %214 = vmatprep.subr.mxu0 0.0
    %215 = vmatpush1.msra.mxu0 0.0
    %216 = vmatprep.subr.mxu0 0.0
    %217 = vmatpush1.msra.mxu0 0.0
    %218 = vmatprep.subr.mxu0 0.0
    %219 = vmatpush1.msra.mxu0 0.0
    %220 = vmatprep.subr.mxu0 0.0
    %221 = vmatpush1.msra.mxu0 0.0
    %222 = vmatprep.subr.mxu0 0.0
    %223 = vmatpush1.msra.mxu0 0.0
    %224 = vmatprep.subr.mxu0 0.0
    %225 = vmatpush1.msra.mxu0 0.0
    %226 = vmatprep.subr.mxu0 0.0
    %227 = vmatpush1.msra.mxu0 0.0
    %228 = vmatprep.subr.mxu0 0.0
    %229 = vmatpush1.msra.mxu0 0.0
    %230 = vmatprep.subr.mxu0 0.0
    %231 = vmatpush1.msra.mxu0 0.0
    %232 = vmatprep.subr.mxu0 0.0
    %233 = vmatpush1.msra.mxu0 0.0
    %234 = vmatprep.subr.mxu0 0.0
    %235 = vmatpush1.msra.mxu0 0.0
    %236 = vmatprep.subr.mxu0 0.0
    %237 = vmatpush1.msra.mxu0 0.0
    %238 = vmatprep.subr.mxu0 0.0
    %239 = vmatpush1.msra.mxu0 0.0
    %240 = vmatprep.subr.mxu0 0.0
    %241 = vmatpush1.msra.mxu0 0.0
    %242 = vmatprep.subr.mxu0 0.0
    %243 = vmatpush1.msra.mxu0 0.0
    %244 = vmatprep.subr.mxu0 0.0
    %245 = vmatpush1.msra.mxu0 0.0
    %246 = vmatprep.subr.mxu0 0.0
    %247 = vmatpush1.msra.mxu0 0.0
    %248 = vmatprep.mubr.f32.mxu0 0.0
    %249 = vmatmul.mubr.f32.gmra.mrb[0].mxu0 %v173
    %v250 = vpop.f32.mrb[0].mxu0
    %v251 = vadd.f32 %v164, %v250
    %v252 = vpop.f32.mrb[0].mxu0
    %v253 = vadd.f32 %v168, %v252
    %254 = vmatprep.mubr.f32.mxu0 0.0
    %255 = vmatmul.mubr.f32.gmra.mrb[0].mxu0 %v176
    %v256 = vpop.f32.mrb[0].mxu0
    %v257 = vadd.f32 %v164, %v256
    %v258 = vpop.f32.mrb[0].mxu0
    %v259 = vadd.f32 %v168, %v258
    %260 = vmatprep.mubr.f32.mxu0 0.0
    %261 = vmatmul.mubr.f32.gmra.mrb[0].mxu0 %v179
    %v262 = vpop.f32.mrb[0].mxu0
    %v263 = vadd.f32 %v164, %v262
    %v264 = vpop.f32.mrb[0].mxu0
    %v265 = vadd.f32 %v168, %v264
    %266 = vmatprep.mubr.f32.mxu0 0.0
    %267 = vmatmul.mubr.f32.gmra.mrb[0].mxu0 %v182
    %v268 = vpop.f32.mrb[0].mxu0
    %v269 = vadd.f32 %v164, %v268
    %v270 = vpop.f32.mrb[0].mxu0
    %v271 = vadd.f32 %v168, %v270
    %272 = vdwg.mxu0
    %v273 = vmax.f32 %v251, 0.0
    %v274 = vmax.f32 %v253, 0.0
    %v275 = vmax.f32 %v257, 0.0
    %v276 = vmax.f32 %v259, 0.0
    %v277 = vmax.f32 %v263, 0.0
    %v278 = vmax.f32 %v265, 0.0
    %v279 = vmax.f32 %v269, 0.0
    %v280 = vmax.f32 %v271, 0.0
    %281 = vst [vmem:[#allocation3] sm:$0xff] %v273
    %282 = vst [vmem:[#allocation3 + $0x8] sm:$0xff] %v274
    %283 = vst [vmem:[#allocation3 + $0x50] sm:$0xff] %v275
    %284 = vst [vmem:[#allocation3 + $0x58] sm:$0xff] %v276
    %285 = vst [vmem:[#allocation3 + $0xa0] sm:$0xff] %v277
    %286 = vst [vmem:[#allocation3 + $0xa8] sm:$0xff] %v278
    %vm295 = vcmask 1046528
    %v296 = vrot.slane %v273, 1
    %v297 = vrot.slane %v275, 1
    %v298 = vsel %vm295, %v296, %v297
    %v299 = vrot.slane %v274, 1
    %v300 = vrot.slane %v276, 1
    %v301 = vsel %vm295, %v299, %v300
    %v302 = vrot.slane %v277, 1
    %v303 = vsel %vm295, %v297, %v302
    %v304 = vrot.slane %v278, 1
    %v305 = vsel %vm295, %v300, %v304
    %v306 = vrot.slane %v279, 1
    %v307 = vsel %vm295, %v302, %v306
    %v308 = vrot.slane %v280, 1
    %v309 = vsel %vm295, %v304, %v308
    %316 = vst [vmem:[#allocation3 + $0x10] sm:$0xff] %v298
    %317 = vst [vmem:[#allocation3 + $0x18] sm:$0xff] %v301
    %318 = vst [vmem:[#allocation3 + $0x60] sm:$0xff] %v303
    %319 = vst [vmem:[#allocation3 + $0x68] sm:$0xff] %v305
    %320 = vst [vmem:[#allocation3 + $0xb0] sm:$0xff] %v307
    %321 = vst [vmem:[#allocation3 + $0xb8] sm:$0xff] %v309
    %vm322 = vcmask 1045504
    %v323 = vrot.slane %v273, 2
    %v324 = vrot.slane %v275, 2
    %v325 = vsel %vm322, %v323, %v324
    %v326 = vrot.slane %v274, 2
    %v327 = vrot.slane %v276, 2
    %v328 = vsel %vm322, %v326, %v327
    %v329 = vrot.slane %v277, 2
    %v330 = vsel %vm322, %v324, %v329
    %v331 = vrot.slane %v278, 2
    %v332 = vsel %vm322, %v327, %v331
    %v333 = vrot.slane %v279, 2
    %v334 = vsel %vm322, %v329, %v333
    %v335 = vrot.slane %v280, 2
    %v336 = vsel %vm322, %v331, %v335
    %343 = vst [vmem:[#allocation3 + $0x20] sm:$0xff] %v325
    %344 = vst [vmem:[#allocation3 + $0x28] sm:$0xff] %v328
    %345 = vst [vmem:[#allocation3 + $0x70] sm:$0xff] %v330
    %346 = vst [vmem:[#allocation3 + $0x78] sm:$0xff] %v332
    %347 = vst [vmem:[#allocation3 + $0xc0] sm:$0xff] %v334
    %348 = vst [vmem:[#allocation3 + $0xc8] sm:$0xff] %v336
    %vm349 = vcmask 1044480
    %v350 = vrot.slane %v273, 3
    %v351 = vrot.slane %v275, 3
    %v352 = vsel %vm349, %v350, %v351
    %v353 = vrot.slane %v274, 3
    %v354 = vrot.slane %v276, 3
    %v355 = vsel %vm349, %v353, %v354
    %v356 = vrot.slane %v277, 3
    %v357 = vsel %vm349, %v351, %v356
    %v358 = vrot.slane %v278, 3
    %v359 = vsel %vm349, %v354, %v358
    %v360 = vrot.slane %v279, 3
    %v361 = vsel %vm349, %v356, %v360
    %v362 = vrot.slane %v280, 3
    %v363 = vsel %vm349, %v358, %v362
    %370 = vst [vmem:[#allocation3 + $0x30] sm:$0xff] %v352
    %371 = vst [vmem:[#allocation3 + $0x38] sm:$0xff] %v355
    %372 = vst [vmem:[#allocation3 + $0x80] sm:$0xff] %v357
    %373 = vst [vmem:[#allocation3 + $0x88] sm:$0xff] %v359
    %374 = vst [vmem:[#allocation3 + $0xd0] sm:$0xff] %v361
    %375 = vst [vmem:[#allocation3 + $0xd8] sm:$0xff] %v363
    %vm376 = vcmask 1043456
    %v377 = vrot.slane %v273, 4
    %v378 = vrot.slane %v275, 4
    %v379 = vsel %vm376, %v377, %v378
    %v380 = vrot.slane %v274, 4
    %v381 = vrot.slane %v276, 4
    %v382 = vsel %vm376, %v380, %v381
    %v383 = vrot.slane %v277, 4
    %v384 = vsel %vm376, %v378, %v383
    %v385 = vrot.slane %v278, 4
    %v386 = vsel %vm376, %v381, %v385
    %v387 = vrot.slane %v279, 4
    %v388 = vsel %vm376, %v383, %v387
    %v389 = vrot.slane %v280, 4
    %v390 = vsel %vm376, %v385, %v389
    %397 = vst [vmem:[#allocation3 + $0x40] sm:$0xff] %v379
    %398 = vst [vmem:[#allocation3 + $0x48] sm:$0xff] %v382
    %399 = vst [vmem:[#allocation3 + $0x90] sm:$0xff] %v384
    %400 = vst [vmem:[#allocation3 + $0x98] sm:$0xff] %v386
    %401 = vst [vmem:[#allocation3 + $0xe0] sm:$0xff] %v388
    %402 = vst [vmem:[#allocation3 + $0xe8] sm:$0xff] %v390
    %v403 = vld [vmem:[#allocation3] sm:$0xff]
    %v404 = vld [vmem:[#allocation3 + $0x8] sm:$0xff]
    %v405 = vld [vmem:[#allocation3 + $0x10] sm:$0xff]
    %v406 = vld [vmem:[#allocation3 + $0x18] sm:$0xff]
    %v407 = vld [vmem:[#allocation3 + $0x20] sm:$0xff]
    %v408 = vld [vmem:[#allocation3 + $0x28] sm:$0xff]
    %v409 = vld [vmem:[#allocation3 + $0x30] sm:$0xff]
    %v410 = vld [vmem:[#allocation3 + $0x38] sm:$0xff]
    %v411 = vld [vmem:[#allocation3 + $0x40] sm:$0xff]
    %v412 = vld [vmem:[#allocation3 + $0x48] sm:$0xff]
    %v413 = vld [vmem:[#allocation3 + $0x50] sm:$0xff]
    %v414 = vld [vmem:[#allocation3 + $0x58] sm:$0xff]
    %v415 = vld [vmem:[#allocation3 + $0x60] sm:$0xff]
    %v416 = vld [vmem:[#allocation3 + $0x68] sm:$0xff]
    %v417 = vld [vmem:[#allocation3 + $0x70] sm:$0xff]
    %v418 = vld [vmem:[#allocation3 + $0x78] sm:$0xff]
    %v419 = vld [vmem:[#allocation3 + $0x80] sm:$0xff]
    %v420 = vld [vmem:[#allocation3 + $0x88] sm:$0xff]
    %v421 = vld [vmem:[#allocation3 + $0x90] sm:$0xff]
    %v422 = vld [vmem:[#allocation3 + $0x98] sm:$0xff]
    %v423 = vld [vmem:[#allocation3 + $0xa0] sm:$0xff]
    %v424 = vld [vmem:[#allocation3 + $0xa8] sm:$0xff]
    %v425 = vld [vmem:[#allocation3 + $0xb0] sm:$0xff]
    %v426 = vld [vmem:[#allocation3 + $0xb8] sm:$0xff]
    %v427 = vld [vmem:[#allocation3 + $0xc0] sm:$0xff]
    %v428 = vld [vmem:[#allocation3 + $0xc8] sm:$0xff]
    %v429 = vld [vmem:[#allocation3 + $0xd0] sm:$0xff]
    %v430 = vld [vmem:[#allocation3 + $0xd8] sm:$0xff]
    %v431 = vld [vmem:[#allocation3 + $0xe0] sm:$0xff]
    %v432 = vld [vmem:[#allocation3 + $0xe8] sm:$0xff]
    %v433 = vld [vmem:[%s3] sm:$0xff]
    %v434 = vld [vmem:[%s3 + $0x8] sm:$0xff]
    %v435 = vld [vmem:[%s3 + $0x10] sm:$0xff]
    %v436 = vld [vmem:[%s3 + $0x18] sm:$0xff]
    %v437 = vld [vmem:[%s3 + $0x20] sm:$0xff]
    %v438 = vld [vmem:[%s3 + $0x28] sm:$0xff]
    %v439 = vld [vmem:[%s3 + $0x30] sm:$0xff]
    %v440 = vld [vmem:[%s3 + $0x38] sm:$0xff]
    %v441 = vld [vmem:[%s3 + $0x40] sm:$0xff]
    %v442 = vld [vmem:[%s3 + $0x48] sm:$0xff]
    %v443 = vld [vmem:[%s3 + $0x50] sm:$0xff]
    %v444 = vld [vmem:[%s3 + $0x58] sm:$0xff]
    %v445 = vld [vmem:[%s3 + $0x60] sm:$0xff]
    %v446 = vld [vmem:[%s3 + $0x68] sm:$0xff]
    %v447 = vld [vmem:[%s3 + $0x70] sm:$0xff]
    %v448 = vld [vmem:[%s3 + $0x78] sm:$0xff]
    %v449 = vld [vmem:[%s3 + $0x80] sm:$0xff]
    %v450 = vld [vmem:[%s3 + $0x88] sm:$0xff]
    %v451 = vld [vmem:[%s3 + $0x90] sm:$0xff]
    %v452 = vld [vmem:[%s3 + $0x98] sm:$0xff]
    %v453 = vld [vmem:[%s3 + $0xa0] sm:$0xff]
    %v454 = vld [vmem:[%s3 + $0xa8] sm:$0xff]
    %v455 = vld [vmem:[%s3 + $0xb0] sm:$0xff]
    %v456 = vld [vmem:[%s3 + $0xb8] sm:$0xff]
    %v457 = vld [vmem:[%s3 + $0xc0] sm:$0xff]
    %v458 = vld [vmem:[%s3 + $0xc8] sm:$0xff]
    %v459 = vld [vmem:[%s3 + $0xd0] sm:$0xff]
    %v460 = vld [vmem:[%s3 + $0xd8] sm:$0xff]
    %v461 = vld [vmem:[%s3 + $0xe0] sm:$0xff]
    %v462 = vld [vmem:[%s3 + $0xe8] sm:$0xff]
    %v463 = vld [vmem:[%s3 + $0xf0] sm:$0xff]
    %v464 = vld [vmem:[%s3 + $0xf8] sm:$0xff]
    %v465 = vld [vmem:[%s3 + $0x100] sm:$0xff]
    %v466 = vld [vmem:[%s3 + $0x108] sm:$0xff]
    %v467 = vld [vmem:[%s3 + $0x110] sm:$0xff]
    %v468 = vld [vmem:[%s3 + $0x118] sm:$0xff]
    %v469 = vld [vmem:[%s3 + $0x120] sm:$0xff]
    %v470 = vld [vmem:[%s3 + $0x128] sm:$0xff]
    %v471 = vld [vmem:[%s3 + $0x130] sm:$0xff]
    %v472 = vld [vmem:[%s3 + $0x138] sm:$0xff]
    %v473 = vld [vmem:[%s3 + $0x140] sm:$0xff]
    %v474 = vld [vmem:[%s3 + $0x148] sm:$0xff]
    %v475 = vld [vmem:[%s3 + $0x150] sm:$0xff]
    %v476 = vld [vmem:[%s3 + $0x158] sm:$0xff]
    %v477 = vld [vmem:[%s3 + $0x160] sm:$0xff]
    %v478 = vld [vmem:[%s3 + $0x168] sm:$0xff]
    %v479 = vld [vmem:[%s3 + $0x170] sm:$0xff]
    %v480 = vld [vmem:[%s3 + $0x178] sm:$0xff]
    %v481 = vld [vmem:[%s3 + $0x180] sm:$0xff]
    %v482 = vld [vmem:[%s3 + $0x188] sm:$0xff]
    %v483 = vld [vmem:[%s3 + $0x190] sm:$0xff]
    %v484 = vld [vmem:[%s3 + $0x198] sm:$0xff]
    %v485 = vld [vmem:[%s3 + $0x1a0] sm:$0xff]
    %v486 = vld [vmem:[%s3 + $0x1a8] sm:$0xff]
    %v487 = vld [vmem:[%s3 + $0x1b0] sm:$0xff]
    %v488 = vld [vmem:[%s3 + $0x1b8] sm:$0xff]
    %v489 = vld [vmem:[%s3 + $0x1c0] sm:$0xff]
    %v490 = vld [vmem:[%s3 + $0x1c8] sm:$0xff]
    %v491 = vld [vmem:[%s3 + $0x1d0] sm:$0xff]
    %v492 = vld [vmem:[%s3 + $0x1d8] sm:$0xff]
    %v493 = vld [vmem:[%s3 + $0x1e0] sm:$0xff]
    %v494 = vld [vmem:[%s3 + $0x1e8] sm:$0xff]
    %v495 = vld [vmem:[%s3 + $0x1f0] sm:$0xff]
    %v496 = vld [vmem:[%s3 + $0x1f8] sm:$0xff]
    %v497 = vld [vmem:[%s3 + $0x200] sm:$0xff]
    %v498 = vld [vmem:[%s3 + $0x208] sm:$0xff]
    %v499 = vld [vmem:[%s3 + $0x210] sm:$0xff]
    %v500 = vld [vmem:[%s3 + $0x218] sm:$0xff]
    %v501 = vld [vmem:[%s3 + $0x220] sm:$0xff]
    %v502 = vld [vmem:[%s3 + $0x228] sm:$0xff]
    %v503 = vld [vmem:[%s3 + $0x230] sm:$0xff]
    %v504 = vld [vmem:[%s3 + $0x238] sm:$0xff]
    %v505 = vld [vmem:[%s3 + $0x240] sm:$0xff]
    %v506 = vld [vmem:[%s3 + $0x248] sm:$0xff]
    %v507 = vld [vmem:[%s3 + $0x250] sm:$0xff]
    %v508 = vld [vmem:[%s3 + $0x258] sm:$0xff]
    %v509 = vld [vmem:[%s3 + $0x260] sm:$0xff]
    %v510 = vld [vmem:[%s3 + $0x268] sm:$0xff]
    %v511 = vld [vmem:[%s3 + $0x270] sm:$0xff]
    %v512 = vld [vmem:[%s3 + $0x278] sm:$0xff]
    %v513 = vld [vmem:[%s3 + $0x280] sm:$0xff]
    %v514 = vld [vmem:[%s3 + $0x288] sm:$0xff]
    %v515 = vld [vmem:[%s3 + $0x290] sm:$0xff]
    %v516 = vld [vmem:[%s3 + $0x298] sm:$0xff]
    %v517 = vld [vmem:[%s3 + $0x2a0] sm:$0xff]
    %v518 = vld [vmem:[%s3 + $0x2a8] sm:$0xff]
    %v519 = vld [vmem:[%s3 + $0x2b0] sm:$0xff]
    %v520 = vld [vmem:[%s3 + $0x2b8] sm:$0xff]
    %v521 = vld [vmem:[%s3 + $0x2c0] sm:$0xff]
    %v522 = vld [vmem:[%s3 + $0x2c8] sm:$0xff]
    %v523 = vld [vmem:[%s3 + $0x2d0] sm:$0xff]
    %v524 = vld [vmem:[%s3 + $0x2d8] sm:$0xff]
    %v525 = vld [vmem:[%s3 + $0x2e0] sm:$0xff]
    %v526 = vld [vmem:[%s3 + $0x2e8] sm:$0xff]
    %v527 = vld [vmem:[%s3 + $0x2f0] sm:$0xff]
    %v528 = vld [vmem:[%s3 + $0x2f8] sm:$0xff]
    %v529 = vld [vmem:[%s3 + $0x300] sm:$0xff]
    %v530 = vld [vmem:[%s3 + $0x308] sm:$0xff]
    %v531 = vld [vmem:[%s3 + $0x310] sm:$0xff]
    %v532 = vld [vmem:[%s3 + $0x318] sm:$0xff]
    %v533 = vld [vmem:[%s3 + $0x320] sm:$0xff]
    %v534 = vld [vmem:[%s3 + $0x328] sm:$0xff]
    %v535 = vld [vmem:[%s3 + $0x330] sm:$0xff]
    %v536 = vld [vmem:[%s3 + $0x338] sm:$0xff]
    %v537 = vld [vmem:[%s3 + $0x340] sm:$0xff]
    %v538 = vld [vmem:[%s3 + $0x348] sm:$0xff]
    %v539 = vld [vmem:[%s3 + $0x350] sm:$0xff]
    %v540 = vld [vmem:[%s3 + $0x358] sm:$0xff]
    %v541 = vld [vmem:[%s3 + $0x360] sm:$0xff]
    %v542 = vld [vmem:[%s3 + $0x368] sm:$0xff]
    %v543 = vld [vmem:[%s3 + $0x370] sm:$0xff]
    %v544 = vld [vmem:[%s3 + $0x378] sm:$0xff]
    %v545 = vld [vmem:[%s3 + $0x380] sm:$0xff]
    %v546 = vld [vmem:[%s3 + $0x388] sm:$0xff]
    %v547 = vld [vmem:[%s3 + $0x390] sm:$0xff]
    %v548 = vld [vmem:[%s3 + $0x398] sm:$0xff]
    %v549 = vld [vmem:[%s3 + $0x3a0] sm:$0xff]
    %v550 = vld [vmem:[%s3 + $0x3a8] sm:$0xff]
    %v551 = vld [vmem:[%s3 + $0x3b0] sm:$0xff]
    %v552 = vld [vmem:[%s3 + $0x3b8] sm:$0xff]
    %v553 = vld [vmem:[%s3 + $0x3c0] sm:$0xff]
    %v554 = vld [vmem:[%s3 + $0x3c8] sm:$0xff]
    %v555 = vld [vmem:[%s3 + $0x3d0] sm:$0xff]
    %v556 = vld [vmem:[%s3 + $0x3d8] sm:$0xff]
    %v557 = vld [vmem:[%s3 + $0x3e0] sm:$0xff]
    %v558 = vld [vmem:[%s3 + $0x3e8] sm:$0xff]
    %v559 = vld [vmem:[%s3 + $0x3f0] sm:$0xff]
    %v560 = vld [vmem:[%s3 + $0x3f8] sm:$0xff]
    %v561 = vld [vmem:[%s3 + $0x400] sm:$0xff]
    %v562 = vld [vmem:[%s3 + $0x408] sm:$0xff]
    %v563 = vld [vmem:[%s3 + $0x410] sm:$0xff]
    %v564 = vld [vmem:[%s3 + $0x418] sm:$0xff]
    %v565 = vld [vmem:[%s3 + $0x420] sm:$0xff]
    %v566 = vld [vmem:[%s3 + $0x428] sm:$0xff]
    %v567 = vld [vmem:[%s3 + $0x430] sm:$0xff]
    %v568 = vld [vmem:[%s3 + $0x438] sm:$0xff]
    %v569 = vld [vmem:[%s3 + $0x440] sm:$0xff]
    %v570 = vld [vmem:[%s3 + $0x448] sm:$0xff]
    %v571 = vld [vmem:[%s3 + $0x450] sm:$0xff]
    %v572 = vld [vmem:[%s3 + $0x458] sm:$0xff]
    %v573 = vld [vmem:[%s3 + $0x460] sm:$0xff]
    %v574 = vld [vmem:[%s3 + $0x468] sm:$0xff]
    %v575 = vld [vmem:[%s3 + $0x470] sm:$0xff]
    %v576 = vld [vmem:[%s3 + $0x478] sm:$0xff]
    %v577 = vld [vmem:[%s3 + $0x480] sm:$0xff]
    %v578 = vld [vmem:[%s3 + $0x488] sm:$0xff]
    %v579 = vld [vmem:[%s3 + $0x490] sm:$0xff]
    %v580 = vld [vmem:[%s3 + $0x498] sm:$0xff]
    %v581 = vld [vmem:[%s3 + $0x4a0] sm:$0xff]
    %v582 = vld [vmem:[%s3 + $0x4a8] sm:$0xff]
    %v583 = vld [vmem:[%s3 + $0x4b0] sm:$0xff]
    %v584 = vld [vmem:[%s3 + $0x4b8] sm:$0xff]
    %v585 = vld [vmem:[%s3 + $0x4c0] sm:$0xff]
    %v586 = vld [vmem:[%s3 + $0x4c8] sm:$0xff]
    %v587 = vld [vmem:[%s3 + $0x4d0] sm:$0xff]
    %v588 = vld [vmem:[%s3 + $0x4d8] sm:$0xff]
    %v589 = vld [vmem:[%s3 + $0x4e0] sm:$0xff]
    %v590 = vld [vmem:[%s3 + $0x4e8] sm:$0xff]
    %v591 = vld [vmem:[%s3 + $0x4f0] sm:$0xff]
    %v592 = vld [vmem:[%s3 + $0x4f8] sm:$0xff]
    %v593 = vld [vmem:[%s3 + $0x500] sm:$0xff]
    %v594 = vld [vmem:[%s3 + $0x508] sm:$0xff]
    %v595 = vld [vmem:[%s3 + $0x510] sm:$0xff]
    %v596 = vld [vmem:[%s3 + $0x518] sm:$0xff]
    %v597 = vld [vmem:[%s3 + $0x520] sm:$0xff]
    %v598 = vld [vmem:[%s3 + $0x528] sm:$0xff]
    %v599 = vld [vmem:[%s3 + $0x530] sm:$0xff]
    %v600 = vld [vmem:[%s3 + $0x538] sm:$0xff]
    %v601 = vld [vmem:[%s3 + $0x540] sm:$0xff]
    %v602 = vld [vmem:[%s3 + $0x548] sm:$0xff]
    %v603 = vld [vmem:[%s3 + $0x550] sm:$0xff]
    %v604 = vld [vmem:[%s3 + $0x558] sm:$0xff]
    %v605 = vld [vmem:[%s3 + $0x560] sm:$0xff]
    %v606 = vld [vmem:[%s3 + $0x568] sm:$0xff]
    %v607 = vld [vmem:[%s3 + $0x570] sm:$0xff]
    %v608 = vld [vmem:[%s3 + $0x578] sm:$0xff]
    %v609 = vld [vmem:[%s3 + $0x580] sm:$0xff]
    %v610 = vld [vmem:[%s3 + $0x588] sm:$0xff]
    %v611 = vld [vmem:[%s3 + $0x590] sm:$0xff]
    %v612 = vld [vmem:[%s3 + $0x598] sm:$0xff]
    %v613 = vld [vmem:[%s3 + $0x5a0] sm:$0xff]
    %v614 = vld [vmem:[%s3 + $0x5a8] sm:$0xff]
    %v615 = vld [vmem:[%s3 + $0x5b0] sm:$0xff]
    %v616 = vld [vmem:[%s3 + $0x5b8] sm:$0xff]
    %v617 = vld [vmem:[%s3 + $0x5c0] sm:$0xff]
    %v618 = vld [vmem:[%s3 + $0x5c8] sm:$0xff]
    %v619 = vld [vmem:[%s3 + $0x5d0] sm:$0xff]
    %v620 = vld [vmem:[%s3 + $0x5d8] sm:$0xff]
    %v621 = vld [vmem:[%s3 + $0x5e0] sm:$0xff]
    %v622 = vld [vmem:[%s3 + $0x5e8] sm:$0xff]
    %v623 = vld [vmem:[%s3 + $0x5f0] sm:$0xff]
    %v624 = vld [vmem:[%s3 + $0x5f8] sm:$0xff]
    %v625 = vld [vmem:[%s3 + $0x600] sm:$0xff]
    %v626 = vld [vmem:[%s3 + $0x608] sm:$0xff]
    %v627 = vld [vmem:[%s3 + $0x610] sm:$0xff]
    %v628 = vld [vmem:[%s3 + $0x618] sm:$0xff]
    %v629 = vld [vmem:[%s3 + $0x620] sm:$0xff]
    %v630 = vld [vmem:[%s3 + $0x628] sm:$0xff]
    %v631 = vld [vmem:[%s3 + $0x630] sm:$0xff]
    %v632 = vld [vmem:[%s3 + $0x638] sm:$0xff]
    %v633 = vld [vmem:[%s3 + $0x640] sm:$0xff]
    %v634 = vld [vmem:[%s3 + $0x648] sm:$0xff]
    %v635 = vld [vmem:[%s3 + $0x650] sm:$0xff]
    %v636 = vld [vmem:[%s3 + $0x658] sm:$0xff]
    %v637 = vld [vmem:[%s3 + $0x660] sm:$0xff]
    %v638 = vld [vmem:[%s3 + $0x668] sm:$0xff]
    %v639 = vld [vmem:[%s3 + $0x670] sm:$0xff]
    %v640 = vld [vmem:[%s3 + $0x678] sm:$0xff]
    %v641 = vld [vmem:[%s3 + $0x680] sm:$0xff]
    %v642 = vld [vmem:[%s3 + $0x688] sm:$0xff]
    %v643 = vld [vmem:[%s3 + $0x690] sm:$0xff]
    %v644 = vld [vmem:[%s3 + $0x698] sm:$0xff]
    %v645 = vld [vmem:[%s3 + $0x6a0] sm:$0xff]
    %v646 = vld [vmem:[%s3 + $0x6a8] sm:$0xff]
    %v647 = vld [vmem:[%s3 + $0x6b0] sm:$0xff]
    %v648 = vld [vmem:[%s3 + $0x6b8] sm:$0xff]
    %v649 = vld [vmem:[%s3 + $0x6c0] sm:$0xff]
    %v650 = vld [vmem:[%s3 + $0x6c8] sm:$0xff]
    %v651 = vld [vmem:[%s3 + $0x6d0] sm:$0xff]
    %v652 = vld [vmem:[%s3 + $0x6d8] sm:$0xff]
    %v653 = vld [vmem:[%s3 + $0x6e0] sm:$0xff]
    %v654 = vld [vmem:[%s3 + $0x6e8] sm:$0xff]
    %v655 = vld [vmem:[%s3 + $0x6f0] sm:$0xff]
    %v656 = vld [vmem:[%s3 + $0x6f8] sm:$0xff]
    %v657 = vld [vmem:[%s3 + $0x700] sm:$0xff]
    %v658 = vld [vmem:[%s3 + $0x708] sm:$0xff]
    %v659 = vld [vmem:[%s3 + $0x710] sm:$0xff]
    %v660 = vld [vmem:[%s3 + $0x718] sm:$0xff]
    %v661 = vld [vmem:[%s3 + $0x720] sm:$0xff]
    %v662 = vld [vmem:[%s3 + $0x728] sm:$0xff]
    %v663 = vld [vmem:[%s3 + $0x730] sm:$0xff]
    %v664 = vld [vmem:[%s3 + $0x738] sm:$0xff]
    %v665 = vld [vmem:[%s3 + $0x740] sm:$0xff]
    %v666 = vld [vmem:[%s3 + $0x748] sm:$0xff]
    %v667 = vld [vmem:[%s3 + $0x750] sm:$0xff]
    %v668 = vld [vmem:[%s3 + $0x758] sm:$0xff]
    %v669 = vld [vmem:[%s3 + $0x760] sm:$0xff]
    %v670 = vld [vmem:[%s3 + $0x768] sm:$0xff]
    %v671 = vld [vmem:[%s3 + $0x770] sm:$0xff]
    %v672 = vld [vmem:[%s3 + $0x778] sm:$0xff]
    %v673 = vld [vmem:[%s3 + $0x780] sm:$0xff]
    %v674 = vld [vmem:[%s3 + $0x788] sm:$0xff]
    %v675 = vld [vmem:[%s3 + $0x790] sm:$0xff]
    %v676 = vld [vmem:[%s3 + $0x798] sm:$0xff]
    %v677 = vld [vmem:[%s3 + $0x7a0] sm:$0xff]
    %v678 = vld [vmem:[%s3 + $0x7a8] sm:$0xff]
    %v679 = vld [vmem:[%s3 + $0x7b0] sm:$0xff]
    %v680 = vld [vmem:[%s3 + $0x7b8] sm:$0xff]
    %v681 = vld [vmem:[%s3 + $0x7c0] sm:$0xff]
    %v682 = vld [vmem:[%s3 + $0x7c8] sm:$0xff]
    %v683 = vld [vmem:[%s3 + $0x7d0] sm:$0xff]
    %v684 = vld [vmem:[%s3 + $0x7d8] sm:$0xff]
    %v685 = vld [vmem:[%s3 + $0x7e0] sm:$0xff]
    %v686 = vld [vmem:[%s3 + $0x7e8] sm:$0xff]
    %v687 = vld [vmem:[%s3 + $0x7f0] sm:$0xff]
    %v688 = vld [vmem:[%s3 + $0x7f8] sm:$0xff]
    %v689 = vld [vmem:[%s3 + $0x800] sm:$0xff]
    %v690 = vld [vmem:[%s3 + $0x808] sm:$0xff]
    %v691 = vld [vmem:[%s3 + $0x810] sm:$0xff]
    %v692 = vld [vmem:[%s3 + $0x818] sm:$0xff]
    %v693 = vld [vmem:[%s3 + $0x820] sm:$0xff]
    %v694 = vld [vmem:[%s3 + $0x828] sm:$0xff]
    %v695 = vld [vmem:[%s3 + $0x830] sm:$0xff]
    %v696 = vld [vmem:[%s3 + $0x838] sm:$0xff]
    %v697 = vld [vmem:[%s3 + $0x840] sm:$0xff]
    %v698 = vld [vmem:[%s3 + $0x848] sm:$0xff]
    %v699 = vld [vmem:[%s3 + $0x850] sm:$0xff]
    %v700 = vld [vmem:[%s3 + $0x858] sm:$0xff]
    %v701 = vld [vmem:[%s3 + $0x860] sm:$0xff]
    %v702 = vld [vmem:[%s3 + $0x868] sm:$0xff]
    %v703 = vld [vmem:[%s3 + $0x870] sm:$0xff]
    %v704 = vld [vmem:[%s3 + $0x878] sm:$0xff]
    %v705 = vld [vmem:[%s3 + $0x880] sm:$0xff]
    %v706 = vld [vmem:[%s3 + $0x888] sm:$0xff]
    %v707 = vld [vmem:[%s3 + $0x890] sm:$0xff]
    %v708 = vld [vmem:[%s3 + $0x898] sm:$0xff]
    %v709 = vld [vmem:[%s3 + $0x8a0] sm:$0xff]
    %v710 = vld [vmem:[%s3 + $0x8a8] sm:$0xff]
    %v711 = vld [vmem:[%s3 + $0x8b0] sm:$0xff]
    %v712 = vld [vmem:[%s3 + $0x8b8] sm:$0xff]
    %v713 = vld [vmem:[%s3 + $0x8c0] sm:$0xff]
    %v714 = vld [vmem:[%s3 + $0x8c8] sm:$0xff]
    %v715 = vld [vmem:[%s3 + $0x8d0] sm:$0xff]
    %v716 = vld [vmem:[%s3 + $0x8d8] sm:$0xff]
    %v717 = vld [vmem:[%s3 + $0x8e0] sm:$0xff]
    %v718 = vld [vmem:[%s3 + $0x8e8] sm:$0xff]
    %v719 = vld [vmem:[%s3 + $0x8f0] sm:$0xff]
    %v720 = vld [vmem:[%s3 + $0x8f8] sm:$0xff]
    %v721 = vld [vmem:[%s3 + $0x900] sm:$0xff]
    %v722 = vld [vmem:[%s3 + $0x908] sm:$0xff]
    %v723 = vld [vmem:[%s3 + $0x910] sm:$0xff]
    %v724 = vld [vmem:[%s3 + $0x918] sm:$0xff]
    %v725 = vld [vmem:[%s3 + $0x920] sm:$0xff]
    %v726 = vld [vmem:[%s3 + $0x928] sm:$0xff]
    %v727 = vld [vmem:[%s3 + $0x930] sm:$0xff]
    %v728 = vld [vmem:[%s3 + $0x938] sm:$0xff]
    %v729 = vld [vmem:[%s3 + $0x940] sm:$0xff]
    %v730 = vld [vmem:[%s3 + $0x948] sm:$0xff]
    %v731 = vld [vmem:[%s3 + $0x950] sm:$0xff]
    %v732 = vld [vmem:[%s3 + $0x958] sm:$0xff]
    %v733 = vld [vmem:[%s3 + $0x960] sm:$0xff]
    %v734 = vld [vmem:[%s3 + $0x968] sm:$0xff]
    %v735 = vld [vmem:[%s3 + $0x970] sm:$0xff]
    %v736 = vld [vmem:[%s3 + $0x978] sm:$0xff]
    %v737 = vld [vmem:[%s3 + $0x980] sm:$0xff]
    %v738 = vld [vmem:[%s3 + $0x988] sm:$0xff]
    %v739 = vld [vmem:[%s3 + $0x990] sm:$0xff]
    %v740 = vld [vmem:[%s3 + $0x998] sm:$0xff]
    %v741 = vld [vmem:[%s3 + $0x9a0] sm:$0xff]
    %v742 = vld [vmem:[%s3 + $0x9a8] sm:$0xff]
    %v743 = vld [vmem:[%s3 + $0x9b0] sm:$0xff]
    %v744 = vld [vmem:[%s3 + $0x9b8] sm:$0xff]
    %v745 = vld [vmem:[%s3 + $0x9c0] sm:$0xff]
    %v746 = vld [vmem:[%s3 + $0x9c8] sm:$0xff]
    %v747 = vld [vmem:[%s3 + $0x9d0] sm:$0xff]
    %v748 = vld [vmem:[%s3 + $0x9d8] sm:$0xff]
    %v749 = vld [vmem:[%s3 + $0x9e0] sm:$0xff]
    %v750 = vld [vmem:[%s3 + $0x9e8] sm:$0xff]
    %v751 = vld [vmem:[%s3 + $0x9f0] sm:$0xff]
    %v752 = vld [vmem:[%s3 + $0x9f8] sm:$0xff]
    %v753 = vld [vmem:[%s4] sm:$0x3]
    %v755 = vlaneseq
    %v756 = vshrl.u32 %v755, 7
    %v757 = vsub.s32 0, %v756
    %v758 = vrot.slane %v753, %v757
    %v759 = vlaneseq
    %v760 = vshrl.u32 %v759, 7
    %v761 = vsub.s32 1, %v760
    %v762 = vrot.slane %v753, %v761
    %765 = vmatprep.subr.mxu0 %v434
    %766 = vmatpush1.msra.mxu0 %v433
    %767 = vmatprep.subr.mxu0 %v436
    %768 = vmatpush1.msra.mxu0 %v435
    %769 = vmatprep.subr.mxu0 %v438
    %770 = vmatpush1.msra.mxu0 %v437
    %771 = vmatprep.subr.mxu0 %v440
    %772 = vmatpush1.msra.mxu0 %v439
    %773 = vmatprep.subr.mxu0 %v442
    %774 = vmatpush1.msra.mxu0 %v441
    %775 = vmatprep.subr.mxu0 %v444
    %776 = vmatpush1.msra.mxu0 %v443
    %777 = vmatprep.subr.mxu0 %v446
    %778 = vmatpush1.msra.mxu0 %v445
    %779 = vmatprep.subr.mxu0 %v448
    %780 = vmatpush1.msra.mxu0 %v447
    %781 = vmatprep.subr.mxu0 %v450
    %782 = vmatpush1.msra.mxu0 %v449
    %783 = vmatprep.subr.mxu0 %v452
    %784 = vmatpush1.msra.mxu0 %v451
    %785 = vmatprep.subr.mxu0 %v454
    %786 = vmatpush1.msra.mxu0 %v453
    %787 = vmatprep.subr.mxu0 %v456
    %788 = vmatpush1.msra.mxu0 %v455
    %789 = vmatprep.subr.mxu0 %v458
    %790 = vmatpush1.msra.mxu0 %v457
    %791 = vmatprep.subr.mxu0 %v460
    %792 = vmatpush1.msra.mxu0 %v459
    %793 = vmatprep.subr.mxu0 %v462
    %794 = vmatpush1.msra.mxu0 %v461
    %795 = vmatprep.subr.mxu0 %v464
    %796 = vmatpush1.msra.mxu0 %v463
    %797 = vmatprep.subr.mxu0 %v466
    %798 = vmatpush1.msra.mxu0 %v465
    %799 = vmatprep.subr.mxu0 %v468
    %800 = vmatpush1.msra.mxu0 %v467
    %801 = vmatprep.subr.mxu0 %v470
    %802 = vmatpush1.msra.mxu0 %v469
    %803 = vmatprep.subr.mxu0 %v472
    %804 = vmatpush1.msra.mxu0 %v471
    %805 = vmatprep.subr.mxu0 %v474
    %806 = vmatpush1.msra.mxu0 %v473
    %807 = vmatprep.subr.mxu0 %v476
    %808 = vmatpush1.msra.mxu0 %v475
    %809 = vmatprep.subr.mxu0 %v478
    %810 = vmatpush1.msra.mxu0 %v477
    %811 = vmatprep.subr.mxu0 %v480
    %812 = vmatpush1.msra.mxu0 %v479
    %813 = vmatprep.subr.mxu0 %v482
    %814 = vmatpush1.msra.mxu0 %v481
    %815 = vmatprep.subr.mxu0 %v484
    %816 = vmatpush1.msra.mxu0 %v483
    %817 = vmatprep.subr.mxu0 %v486
    %818 = vmatpush1.msra.mxu0 %v485
    %819 = vmatprep.subr.mxu0 %v488
    %820 = vmatpush1.msra.mxu0 %v487
    %821 = vmatprep.subr.mxu0 %v490
    %822 = vmatpush1.msra.mxu0 %v489
    %823 = vmatprep.subr.mxu0 %v492
    %824 = vmatpush1.msra.mxu0 %v491
    %825 = vmatprep.subr.mxu0 %v494
    %826 = vmatpush1.msra.mxu0 %v493
    %827 = vmatprep.subr.mxu0 %v496
    %828 = vmatpush1.msra.mxu0 %v495
    %829 = vmatprep.mubr.f32.mxu0 %v404
    %830 = vmatmul.mubr.f32.gmra.mrb[0].mxu0 %v403
    %v831 = vpop.f32.mrb[0].mxu0
    %v832 = vadd.f32 %v758, %v831
    %v833 = vpop.f32.mrb[0].mxu0
    %v834 = vadd.f32 %v762, %v833
    %835 = vmatprep.mubr.f32.mxu0 %v414
    %836 = vmatmul.mubr.f32.gmra.mrb[0].mxu0 %v413
    %v837 = vpop.f32.mrb[0].mxu0
    %v838 = vpop.f32.mrb[0].mxu0
    %839 = vmatprep.mubr.f32.mxu0 %v424
    %840 = vmatmul.mubr.f32.gmra.mrb[0].mxu0 %v423
    %v841 = vpop.f32.mrb[0].mxu0
    %v842 = vadd.f32 %v758, %v841
    %v843 = vpop.f32.mrb[0].mxu0
    %v844 = vadd.f32 %v762, %v843
    %845 = vdwg.mxu0
    %846 = vmatprep.subr.mxu0 %v498
    %847 = vmatpush1.msra.mxu0 %v497
    %848 = vmatprep.subr.mxu0 %v500
    %849 = vmatpush1.msra.mxu0 %v499
    %850 = vmatprep.subr.mxu0 %v502
    %851 = vmatpush1.msra.mxu0 %v501
    %852 = vmatprep.subr.mxu0 %v504
    %853 = vmatpush1.msra.mxu0 %v503
    %854 = vmatprep.subr.mxu0 %v506
    %855 = vmatpush1.msra.mxu0 %v505
    %856 = vmatprep.subr.mxu0 %v508
    %857 = vmatpush1.msra.mxu0 %v507
    %858 = vmatprep.subr.mxu0 %v510
    %859 = vmatpush1.msra.mxu0 %v509
    %860 = vmatprep.subr.mxu0 %v512
    %861 = vmatpush1.msra.mxu0 %v511
    %862 = vmatprep.subr.mxu0 %v514
    %863 = vmatpush1.msra.mxu0 %v513
    %864 = vmatprep.subr.mxu0 %v516
    %865 = vmatpush1.msra.mxu0 %v515
    %866 = vmatprep.subr.mxu0 %v518
    %867 = vmatpush1.msra.mxu0 %v517
    %868 = vmatprep.subr.mxu0 %v520
    %869 = vmatpush1.msra.mxu0 %v519
    %870 = vmatprep.subr.mxu0 %v522
    %871 = vmatpush1.msra.mxu0 %v521
    %872 = vmatprep.subr.mxu0 %v524
    %873 = vmatpush1.msra.mxu0 %v523
    %874 = vmatprep.subr.mxu0 %v526
    %875 = vmatpush1.msra.mxu0 %v525
    %876 = vmatprep.subr.mxu0 %v528
    %877 = vmatpush1.msra.mxu0 %v527
    %878 = vmatprep.subr.mxu0 %v530
    %879 = vmatpush1.msra.mxu0 %v529
    %880 = vmatprep.subr.mxu0 %v532
    %881 = vmatpush1.msra.mxu0 %v531
    %882 = vmatprep.subr.mxu0 %v534
    %883 = vmatpush1.msra.mxu0 %v533
    %884 = vmatprep.subr.mxu0 %v536
    %885 = vmatpush1.msra.mxu0 %v535
    %886 = vmatprep.subr.mxu0 %v538
    %887 = vmatpush1.msra.mxu0 %v537
    %888 = vmatprep.subr.mxu0 %v540
    %889 = vmatpush1.msra.mxu0 %v539
    %890 = vmatprep.subr.mxu0 %v542
    %891 = vmatpush1.msra.mxu0 %v541
    %892 = vmatprep.subr.mxu0 %v544
    %893 = vmatpush1.msra.mxu0 %v543
    %894 = vmatprep.subr.mxu0 %v546
    %895 = vmatpush1.msra.mxu0 %v545
    %896 = vmatprep.subr.mxu0 %v548
    %897 = vmatpush1.msra.mxu0 %v547
    %898 = vmatprep.subr.mxu0 %v550
    %899 = vmatpush1.msra.mxu0 %v549
    %900 = vmatprep.subr.mxu0 %v552
    %901 = vmatpush1.msra.mxu0 %v551
    %902 = vmatprep.subr.mxu0 %v554
    %903 = vmatpush1.msra.mxu0 %v553
    %904 = vmatprep.subr.mxu0 %v556
    %905 = vmatpush1.msra.mxu0 %v555
    %906 = vmatprep.subr.mxu0 %v558
    %907 = vmatpush1.msra.mxu0 %v557
    %908 = vmatprep.subr.mxu0 %v560
    %909 = vmatpush1.msra.mxu0 %v559
    %910 = vmatprep.mubr.f32.mxu0 %v406
    %911 = vmatmul.mubr.f32.gmra.mrb[0].mxu0 %v405
    %v912 = vpop.f32.mrb[0].mxu0
    %v913 = vadd.f32 %v832, %v912
    %v914 = vpop.f32.mrb[0].mxu0
    %v915 = vadd.f32 %v834, %v914
    %916 = vmatprep.mubr.f32.mxu0 %v416
    %917 = vmatmul.mubr.f32.gmra.mrb[0].mxu0 %v415
    %v918 = vpop.f32.mrb[0].mxu0
    %v919 = vpop.f32.mrb[0].mxu0
    %920 = vmatprep.mubr.f32.mxu0 %v426
    %921 = vmatmul.mubr.f32.gmra.mrb[0].mxu0 %v425
    %v922 = vpop.f32.mrb[0].mxu0
    %v923 = vadd.f32 %v842, %v922
    %v924 = vpop.f32.mrb[0].mxu0
    %v925 = vadd.f32 %v844, %v924
    %926 = vdwg.mxu0
    %927 = vmatprep.subr.mxu0 %v562
    %928 = vmatpush1.msra.mxu0 %v561
    %929 = vmatprep.subr.mxu0 %v564
    %930 = vmatpush1.msra.mxu0 %v563
    %931 = vmatprep.subr.mxu0 %v566
    %932 = vmatpush1.msra.mxu0 %v565
    %933 = vmatprep.subr.mxu0 %v568
    %934 = vmatpush1.msra.mxu0 %v567
    %935 = vmatprep.subr.mxu0 %v570
    %936 = vmatpush1.msra.mxu0 %v569
    %937 = vmatprep.subr.mxu0 %v572
    %938 = vmatpush1.msra.mxu0 %v571
    %939 = vmatprep.subr.mxu0 %v574
    %940 = vmatpush1.msra.mxu0 %v573
    %941 = vmatprep.subr.mxu0 %v576
    %942 = vmatpush1.msra.mxu0 %v575
    %943 = vmatprep.subr.mxu0 %v578
    %944 = vmatpush1.msra.mxu0 %v577
    %945 = vmatprep.subr.mxu0 %v580
    %946 = vmatpush1.msra.mxu0 %v579
    %947 = vmatprep.subr.mxu0 %v582
    %948 = vmatpush1.msra.mxu0 %v581
    %949 = vmatprep.subr.mxu0 %v584
    %950 = vmatpush1.msra.mxu0 %v583
    %951 = vmatprep.subr.mxu0 %v586
    %952 = vmatpush1.msra.mxu0 %v585
    %953 = vmatprep.subr.mxu0 %v588
    %954 = vmatpush1.msra.mxu0 %v587
    %955 = vmatprep.subr.mxu0 %v590
    %956 = vmatpush1.msra.mxu0 %v589
    %957 = vmatprep.subr.mxu0 %v592
    %958 = vmatpush1.msra.mxu0 %v591
    %959 = vmatprep.subr.mxu0 %v594
    %960 = vmatpush1.msra.mxu0 %v593
    %961 = vmatprep.subr.mxu0 %v596
    %962 = vmatpush1.msra.mxu0 %v595
    %963 = vmatprep.subr.mxu0 %v598
    %964 = vmatpush1.msra.mxu0 %v597
    %965 = vmatprep.subr.mxu0 %v600
    %966 = vmatpush1.msra.mxu0 %v599
    %967 = vmatprep.subr.mxu0 %v602
    %968 = vmatpush1.msra.mxu0 %v601
    %969 = vmatprep.subr.mxu0 %v604
    %970 = vmatpush1.msra.mxu0 %v603
    %971 = vmatprep.subr.mxu0 %v606
    %972 = vmatpush1.msra.mxu0 %v605
    %973 = vmatprep.subr.mxu0 %v608
    %974 = vmatpush1.msra.mxu0 %v607
    %975 = vmatprep.subr.mxu0 %v610
    %976 = vmatpush1.msra.mxu0 %v609
    %977 = vmatprep.subr.mxu0 %v612
    %978 = vmatpush1.msra.mxu0 %v611
    %979 = vmatprep.subr.mxu0 %v614
    %980 = vmatpush1.msra.mxu0 %v613
    %981 = vmatprep.subr.mxu0 %v616
    %982 = vmatpush1.msra.mxu0 %v615
    %983 = vmatprep.subr.mxu0 %v618
    %984 = vmatpush1.msra.mxu0 %v617
    %985 = vmatprep.subr.mxu0 %v620
    %986 = vmatpush1.msra.mxu0 %v619
    %987 = vmatprep.subr.mxu0 %v622
    %988 = vmatpush1.msra.mxu0 %v621
    %989 = vmatprep.subr.mxu0 %v624
    %990 = vmatpush1.msra.mxu0 %v623
    %991 = vmatprep.mubr.f32.mxu0 %v408
    %992 = vmatmul.mubr.f32.gmra.mrb[0].mxu0 %v407
    %v993 = vpop.f32.mrb[0].mxu0
    %v994 = vadd.f32 %v913, %v993
    %v995 = vpop.f32.mrb[0].mxu0
    %v996 = vadd.f32 %v915, %v995
    %997 = vmatprep.mubr.f32.mxu0 %v418
    %998 = vmatmul.mubr.f32.gmra.mrb[0].mxu0 %v417
    %v999 = vpop.f32.mrb[0].mxu0
    %v1000 = vpop.f32.mrb[0].mxu0
    %1001 = vmatprep.mubr.f32.mxu0 %v428
    %1002 = vmatmul.mubr.f32.gmra.mrb[0].mxu0 %v427
    %v1003 = vpop.f32.mrb[0].mxu0
    %v1004 = vadd.f32 %v923, %v1003
    %v1005 = vpop.f32.mrb[0].mxu0
    %v1006 = vadd.f32 %v925, %v1005
    %1007 = vdwg.mxu0
    %1008 = vmatprep.subr.mxu0 %v626
    %1009 = vmatpush1.msra.mxu0 %v625
    %1010 = vmatprep.subr.mxu0 %v628
    %1011 = vmatpush1.msra.mxu0 %v627
    %1012 = vmatprep.subr.mxu0 %v630
    %1013 = vmatpush1.msra.mxu0 %v629
    %1014 = vmatprep.subr.mxu0 %v632
    %1015 = vmatpush1.msra.mxu0 %v631
    %1016 = vmatprep.subr.mxu0 %v634
    %1017 = vmatpush1.msra.mxu0 %v633
    %1018 = vmatprep.subr.mxu0 %v636
    %1019 = vmatpush1.msra.mxu0 %v635
    %1020 = vmatprep.subr.mxu0 %v638
    %1021 = vmatpush1.msra.mxu0 %v637
    %1022 = vmatprep.subr.mxu0 %v640
    %1023 = vmatpush1.msra.mxu0 %v639
    %1024 = vmatprep.subr.mxu0 %v642
    %1025 = vmatpush1.msra.mxu0 %v641
    %1026 = vmatprep.subr.mxu0 %v644
    %1027 = vmatpush1.msra.mxu0 %v643
    %1028 = vmatprep.subr.mxu0 %v646
    %1029 = vmatpush1.msra.mxu0 %v645
    %1030 = vmatprep.subr.mxu0 %v648
    %1031 = vmatpush1.msra.mxu0 %v647
    %1032 = vmatprep.subr.mxu0 %v650
    %1033 = vmatpush1.msra.mxu0 %v649
    %1034 = vmatprep.subr.mxu0 %v652
    %1035 = vmatpush1.msra.mxu0 %v651
    %1036 = vmatprep.subr.mxu0 %v654
    %1037 = vmatpush1.msra.mxu0 %v653
    %1038 = vmatprep.subr.mxu0 %v656
    %1039 = vmatpush1.msra.mxu0 %v655
    %1040 = vmatprep.subr.mxu0 %v658
    %1041 = vmatpush1.msra.mxu0 %v657
    %1042 = vmatprep.subr.mxu0 %v660
    %1043 = vmatpush1.msra.mxu0 %v659
    %1044 = vmatprep.subr.mxu0 %v662
    %1045 = vmatpush1.msra.mxu0 %v661
    %1046 = vmatprep.subr.mxu0 %v664
    %1047 = vmatpush1.msra.mxu0 %v663
    %1048 = vmatprep.subr.mxu0 %v666
    %1049 = vmatpush1.msra.mxu0 %v665
    %1050 = vmatprep.subr.mxu0 %v668
    %1051 = vmatpush1.msra.mxu0 %v667
    %1052 = vmatprep.subr.mxu0 %v670
    %1053 = vmatpush1.msra.mxu0 %v669
    %1054 = vmatprep.subr.mxu0 %v672
    %1055 = vmatpush1.msra.mxu0 %v671
    %1056 = vmatprep.subr.mxu0 %v674
    %1057 = vmatpush1.msra.mxu0 %v673
    %1058 = vmatprep.subr.mxu0 %v676
    %1059 = vmatpush1.msra.mxu0 %v675
    %1060 = vmatprep.subr.mxu0 %v678
    %1061 = vmatpush1.msra.mxu0 %v677
    %1062 = vmatprep.subr.mxu0 %v680
    %1063 = vmatpush1.msra.mxu0 %v679
    %1064 = vmatprep.subr.mxu0 %v682
    %1065 = vmatpush1.msra.mxu0 %v681
    %1066 = vmatprep.subr.mxu0 %v684
    %1067 = vmatpush1.msra.mxu0 %v683
    %1068 = vmatprep.subr.mxu0 %v686
    %1069 = vmatpush1.msra.mxu0 %v685
    %1070 = vmatprep.subr.mxu0 %v688
    %1071 = vmatpush1.msra.mxu0 %v687
    %1072 = vmatprep.mubr.f32.mxu0 %v410
    %1073 = vmatmul.mubr.f32.gmra.mrb[0].mxu0 %v409
    %v1074 = vpop.f32.mrb[0].mxu0
    %v1075 = vadd.f32 %v994, %v1074
    %v1076 = vpop.f32.mrb[0].mxu0
    %v1077 = vadd.f32 %v996, %v1076
    %1078 = vmatprep.mubr.f32.mxu0 %v420
    %1079 = vmatmul.mubr.f32.gmra.mrb[0].mxu0 %v419
    %v1080 = vpop.f32.mrb[0].mxu0
    %v1081 = vpop.f32.mrb[0].mxu0
    %1082 = vmatprep.mubr.f32.mxu0 %v430
    %1083 = vmatmul.mubr.f32.gmra.mrb[0].mxu0 %v429
    %v1084 = vpop.f32.mrb[0].mxu0
    %v1085 = vadd.f32 %v1004, %v1084
    %v1086 = vpop.f32.mrb[0].mxu0
    %v1087 = vadd.f32 %v1006, %v1086
    %1088 = vdwg.mxu0
    %1089 = vmatprep.subr.mxu0 %v690
    %1090 = vmatpush1.msra.mxu0 %v689
    %1091 = vmatprep.subr.mxu0 %v692
    %1092 = vmatpush1.msra.mxu0 %v691
    %1093 = vmatprep.subr.mxu0 %v694
    %1094 = vmatpush1.msra.mxu0 %v693
    %1095 = vmatprep.subr.mxu0 %v696
    %1096 = vmatpush1.msra.mxu0 %v695
    %1097 = vmatprep.subr.mxu0 %v698
    %1098 = vmatpush1.msra.mxu0 %v697
    %1099 = vmatprep.subr.mxu0 %v700
    %1100 = vmatpush1.msra.mxu0 %v699
    %1101 = vmatprep.subr.mxu0 %v702
    %1102 = vmatpush1.msra.mxu0 %v701
    %1103 = vmatprep.subr.mxu0 %v704
    %1104 = vmatpush1.msra.mxu0 %v703
    %1105 = vmatprep.subr.mxu0 %v706
    %1106 = vmatpush1.msra.mxu0 %v705
    %1107 = vmatprep.subr.mxu0 %v708
    %1108 = vmatpush1.msra.mxu0 %v707
    %1109 = vmatprep.subr.mxu0 %v710
    %1110 = vmatpush1.msra.mxu0 %v709
    %1111 = vmatprep.subr.mxu0 %v712
    %1112 = vmatpush1.msra.mxu0 %v711
    %1113 = vmatprep.subr.mxu0 %v714
    %1114 = vmatpush1.msra.mxu0 %v713
    %1115 = vmatprep.subr.mxu0 %v716
    %1116 = vmatpush1.msra.mxu0 %v715
    %1117 = vmatprep.subr.mxu0 %v718
    %1118 = vmatpush1.msra.mxu0 %v717
    %1119 = vmatprep.subr.mxu0 %v720
    %1120 = vmatpush1.msra.mxu0 %v719
    %1121 = vmatprep.subr.mxu0 %v722
    %1122 = vmatpush1.msra.mxu0 %v721
    %1123 = vmatprep.subr.mxu0 %v724
    %1124 = vmatpush1.msra.mxu0 %v723
    %1125 = vmatprep.subr.mxu0 %v726
    %1126 = vmatpush1.msra.mxu0 %v725
    %1127 = vmatprep.subr.mxu0 %v728
    %1128 = vmatpush1.msra.mxu0 %v727
    %1129 = vmatprep.subr.mxu0 %v730
    %1130 = vmatpush1.msra.mxu0 %v729
    %1131 = vmatprep.subr.mxu0 %v732
    %1132 = vmatpush1.msra.mxu0 %v731
    %1133 = vmatprep.subr.mxu0 %v734
    %1134 = vmatpush1.msra.mxu0 %v733
    %1135 = vmatprep.subr.mxu0 %v736
    %1136 = vmatpush1.msra.mxu0 %v735
    %1137 = vmatprep.subr.mxu0 %v738
    %1138 = vmatpush1.msra.mxu0 %v737
    %1139 = vmatprep.subr.mxu0 %v740
    %1140 = vmatpush1.msra.mxu0 %v739
    %1141 = vmatprep.subr.mxu0 %v742
    %1142 = vmatpush1.msra.mxu0 %v741
    %1143 = vmatprep.subr.mxu0 %v744
    %1144 = vmatpush1.msra.mxu0 %v743
    %1145 = vmatprep.subr.mxu0 %v746
    %1146 = vmatpush1.msra.mxu0 %v745
    %1147 = vmatprep.subr.mxu0 %v748
    %1148 = vmatpush1.msra.mxu0 %v747
    %1149 = vmatprep.subr.mxu0 %v750
    %1150 = vmatpush1.msra.mxu0 %v749
    %1151 = vmatprep.subr.mxu0 %v752
    %1152 = vmatpush1.msra.mxu0 %v751
    %1153 = vmatprep.mubr.f32.mxu0 %v412
    %1154 = vmatmul.mubr.f32.gmra.mrb[0].mxu0 %v411
    %v1155 = vpop.f32.mrb[0].mxu0
    %v1156 = vadd.f32 %v1075, %v1155
    %v1157 = vpop.f32.mrb[0].mxu0
    %v1158 = vadd.f32 %v1077, %v1157
    %1159 = vmatprep.mubr.f32.mxu0 %v422
    %1160 = vmatmul.mubr.f32.gmra.mrb[0].mxu0 %v421
    %v1161 = vpop.f32.mrb[0].mxu0
    %v1162 = vpop.f32.mrb[0].mxu0
    %1163 = vmatprep.mubr.f32.mxu0 %v432
    %1164 = vmatmul.mubr.f32.gmra.mrb[0].mxu0 %v431
    %v1165 = vpop.f32.mrb[0].mxu0
    %v1166 = vadd.f32 %v1085, %v1165
    %v1167 = vpop.f32.mrb[0].mxu0
    %v1168 = vadd.f32 %v1087, %v1167
    %1169 = vdwg.mxu0
    %v1170 = vmax.f32 %v1156, 0.0
    %v1171 = vmax.f32 %v1158, 0.0
    %v1172 = vmax.f32 %v1166, 0.0
    %v1173 = vmax.f32 %v1168, 0.0
    %1174 = vst [vmem:[#allocation4] sm:$0xff] %v1170
    %vm1175 = vcmask 261120
    %1176 = vst.msk [vmem:[#allocation4 + $0x8] sm:$0xff] %vm1175, %v1171
    %1177 = vst [vmem:[#allocation4 + $0x10] sm:$0xff] %v1172
    %1178 = vst.msk [vmem:[#allocation4 + $0x18] sm:$0xff] %vm1175, %v1173
    // Predicated region
    $region22: #{tpu_custom_call.1} parent=1 // pred_check
      _
    $region23: #{tpu_custom_call.1} parent=1 // pred_check_branch
      %1180 = sbr.rel (0) target = $region25
    $region24: #{tpu_custom_call.1} parent=1 // pred_region
      %s1182 = ssub.s32 512, 512
      %1183 = vsyncadd [#allocation5], %s1182
      %s1184 = sshll.u32 [#allocation4], 4
      %s1185 = int_to_ptr.vmem [resolvable:$true] %s1184
      %1190 = dma.vmem_to_hbm [thread:$0]  %s1185, 512, %s5, [#allocation5], 256, 256, 16
    $region25: #{tpu_custom_call.1} parent=1 // pred_fallthru
      _
    // Predicated region
    $region26: #{tpu_custom_call.1} parent=1 // pred_check
      _
    $region27: #{tpu_custom_call.1} parent=1 // pred_check_branch
      %1192 = sbr.rel (0) target = $region29
    $region28: #{tpu_custom_call.1} parent=1 // pred_region
      %1193 = dma.done [#allocation5], 512
    $region29: #{tpu_custom_call.1} parent=1 // pred_fallthru
      _
    %1194 = vsyncpa [#allocation5], 1

</llo_original>
